<compile_context>
chip_gen: v5e
topology: v5e:2x2
jax: 0.10.0
libtpu: 0.0.40
codegen_flags: <defaults>
</compile_context>

<pallas_src>
import functools

import jax
import jax.numpy as jnp
from jax.experimental import pallas as pl
from jax.experimental.pallas import tpu as pltpu

_LANE = 128


def _round_up(v: int, m: int) -> int:
    return (v + m - 1) // m * m


def _bessel_kernel(xt_ref, w_ref, o_ref, *, prefactor: float, reps: int):
    # xt_ref: (f, rt)   f32 distances; column r of this tile holds output row r,
    #                   sublane m is the m-th distance packed into that row.
    # w_ref:  (128, 1)  f32 weights already scaled by 1/r_max, tiled so that
    #                   sublane m*B + b holds weight b.
    # o_ref:  (rt, 128) f32 output tile; lane m*B + b of row r is basis b of
    #                   distance r*f + m  (bit-identical to [rt*f, B] row-major).
    xt = xt_ref[...]                                        # (f, rt)
    f, rt = xt.shape
    # One reciprocal per distance (EUP), with 2/r_max folded in.
    inv = prefactor * pl.reciprocal(xt, approx=False)       # (f, rt)
    # Expand to the full 128-sublane compute shape: repeat every distance row
    # `reps` times consecutively (broadcast along a new middle dim + merge).
    x_rep = jnp.broadcast_to(xt[:, None, :], (f, reps, rt)).reshape(f * reps, rt)
    inv_rep = jnp.broadcast_to(inv[:, None, :], (f, reps, rt)).reshape(f * reps, rt)
    y = jnp.sin(w_ref[...] * x_rep) * inv_rep               # (128, rt)
    # Single minor-dim transpose into store layout (XLU; hidden under sin).
    o_ref[...] = y.T                                        # (rt, 128)


def bessel_basis(x: jax.Array, bessel_weights: jax.Array, r_max: float,
                 *, tile_n: int = 131072) -> jax.Array:
    """x: [N] f32 distances, bessel_weights: [num_basis] f32 -> [N, num_basis]."""
    n = int(x.shape[0])
    num_basis = int(bessel_weights.shape[0])
    if num_basis > _LANE:
        # TODO(synk): num_basis > 128 needs a different lane packing (module
        # default is 8, so this path is not implemented here).
        raise NotImplementedError("num_basis > 128 is not supported")
    if n == 0:
        return jnp.zeros((0, num_basis), jnp.float32)

    # Pad the basis dim to a power of two so it divides the 128-lane width.
    b_pad = max(1, 1 << (num_basis - 1).bit_length())
    f = _LANE // b_pad                      # distances packed per 128-lane row
    prefactor = 2.0 / float(r_max)

    # Weights: fold in 1/r_max, zero-pad (sin(0*x)=0 -> harmless), tile across
    # 128 sublanes in [distance-major, basis-minor] order -> shape (128, 1).
    w = bessel_weights.astype(jnp.float32) / float(r_max)
    if b_pad != num_basis:
        w = jnp.pad(w, (0, b_pad - num_basis))
    w128 = jnp.tile(w, f).reshape(_LANE, 1)

    # Output rows (f distances per row) and per-grid-step row tile.
    rows = -(-n // f)
    rows_cap = max(128, min(tile_n // f, 8192))     # <= 4 MiB f32 output block
    if rows <= 128:
        grid = 1
        rt = _round_up(rows, 8)
    else:
        grid = max(-(-rows // rows_cap), 2)         # >=2 steps: v7x megacore
        rt = _round_up(-(-rows // grid), 128)
        grid = -(-rows // rt)
    rows_pad = grid * rt
    n_pad = rows_pad * f

    xf = x.astype(jnp.float32)
    if n_pad != n:
        # Pad with 1.0 so the reciprocal stays finite in padded columns.
        xf = jnp.pad(xf, (0, n_pad - n), constant_values=1.0)
    # (n_pad,) -> (f, rows_pad): column r holds distances r*f .. r*f + f - 1.
    xt = xf.reshape(rows_pad, f).T

    kernel = functools.partial(_bessel_kernel, prefactor=prefactor, reps=b_pad)
    out = pl.pallas_call(
        kernel,
        out_shape=jax.ShapeDtypeStruct((rows_pad, _LANE), jnp.float32),
        grid_spec=pltpu.PrefetchScalarGridSpec(
            num_scalar_prefetch=0,
            grid=(grid,),
            in_specs=[
                pl.BlockSpec((f, rt), lambda i: (0, i)),        # distances
                pl.BlockSpec((_LANE, 1), lambda i: (0, 0)),     # weights (hoisted)
            ],
            out_specs=pl.BlockSpec((rt, _LANE), lambda i: (i, 0)),
        ),
        compiler_params=pltpu.CompilerParams(
            dimension_semantics=("parallel",)),
        cost_estimate=pl.CostEstimate(
            flops=3 * n_pad * b_pad,
            transcendentals=n_pad * b_pad,
            bytes_accessed=4 * n_pad * (1 + b_pad) + 4 * _LANE),
    )(xt, w128)

    # (rows_pad, 128) is bit-identical to [n_pad, b_pad] row-major: the reshape
    # is free; the slice only copies when N / num_basis are unaligned.
    out = out.reshape(n_pad, b_pad)
    if (n_pad, b_pad) != (n, num_basis):
        out = out[:n, :num_basis]
    return out


if __name__ == "__main__":
    r_max = 5.0
    num_basis = 8

    # Deterministic params, matching torch.linspace(1, num_basis) * pi.
    bessel_weights = jnp.linspace(1.0, float(num_basis), num_basis,
                                  dtype=jnp.float32) * jnp.pi

    key = jax.random.PRNGKey(0)

    def reference(xv):
        return (2.0 / r_max) * jnp.sin(
            bessel_weights[None, :] * xv[:, None] / r_max) / xv[:, None]

    # Small unaligned edge count (exercises padding + tail slice) and a larger
    # aligned one (exercises the multi-step grid + zero-copy return path).
    for n_edges, k in ((200, 0), (8192, 1)):
        xk = jax.random.uniform(jax.random.fold_in(key, k), (n_edges,),
                                dtype=jnp.float32, minval=0.1, maxval=r_max)
        out = jax.block_until_ready(bessel_basis(xk, bessel_weights, r_max))
        assert out.shape == (n_edges, num_basis)
        assert jnp.allclose(out, reference(xk), atol=1e-5, rtol=1e-5)

    print("KERNEL_OK")
</pallas_src>

<mosaic_0001>
module attributes {stable_mosaic.version = 11 : i64} {
  func.func @_bessel_kernel(%arg0: i32, %arg1: memref<16x16xf32, #tpu.memory_space<vmem>>, %arg2: memref<128x1xf32, #tpu.memory_space<vmem>>, %arg3: memref<16x128xf32, #tpu.memory_space<vmem>>) attributes {dimension_semantics = [#tpu.dimension_semantics<parallel>], iteration_bounds = array<i64: 1>, scalar_prefetch = 0 : i64, scratch_operands = 0 : i64, tpu.core_type = #tpu.core_type<tc>, window_params = [{transform_indices = @transform_0, window_bounds = array<i64: 16, 16>}, {pipeline_mode = #tpu.pipeline_mode<synchronous>, transform_indices = @transform_1, window_bounds = array<i64: 128, 1>}, {transform_indices = @transform_2, window_bounds = array<i64: 16, 128>}]} {
    %c0 = arith.constant 0 : index
    %c0_0 = arith.constant 0 : index
    %0 = vector.load %arg1[%c0, %c0_0] : memref<16x16xf32, #tpu.memory_space<vmem>>, vector<16x16xf32>
    %1 = tpu.reciprocal %0 : vector<16x16xf32> -> vector<16x16xf32>
    %cst = arith.constant 4.000000e-01 : f32
    %2 = vector.broadcast %cst : f32 to vector<16x16xf32>
    %3 = arith.mulf %2, %1 : vector<16x16xf32>
    %4 = vector.shape_cast %0 : vector<16x16xf32> to vector<16x1x16xf32>
    %5 = vector.shape_cast %4 : vector<16x1x16xf32> to vector<16x1x16xf32>
    %6 = vector.broadcast %5 : vector<16x1x16xf32> to vector<16x8x16xf32>
    %7 = vector.shape_cast %6 : vector<16x8x16xf32> to vector<128x16xf32>
    %8 = vector.shape_cast %3 : vector<16x16xf32> to vector<16x1x16xf32>
    %9 = vector.shape_cast %8 : vector<16x1x16xf32> to vector<16x1x16xf32>
    %10 = vector.broadcast %9 : vector<16x1x16xf32> to vector<16x8x16xf32>
    %11 = vector.shape_cast %10 : vector<16x8x16xf32> to vector<128x16xf32>
    %c0_1 = arith.constant 0 : index
    %c0_2 = arith.constant 0 : index
    %12 = vector.load %arg2[%c0_1, %c0_2] : memref<128x1xf32, #tpu.memory_space<vmem>>, vector<128x1xf32>
    %13 = vector.broadcast %12 : vector<128x1xf32> to vector<128x16xf32>
    %14 = arith.mulf %13, %7 : vector<128x16xf32>
    %15 = math.sin %14 : vector<128x16xf32>
    %16 = arith.mulf %15, %11 : vector<128x16xf32>
    %17 = tpu.transpose %16, [1, 0] : vector<128x16xf32> -> vector<16x128xf32>
    %c0_3 = arith.constant 0 : index
    %c0_4 = arith.constant 0 : index
    %18 = vector.load %arg3[%c0_3, %c0_4] : memref<16x128xf32, #tpu.memory_space<vmem>>, vector<16x128xf32>
    tpu.vector_store %arg3[%c0_3, %c0_4], %17 {strides = array<i32>} : memref<16x128xf32, #tpu.memory_space<vmem>>, vector<16x128xf32>,
    return
  }
  func.func @transform_0(%arg0: i32) -> (i32, i32) {
    %c0_i32 = arith.constant 0 : i32
    %c0_i32_0 = arith.constant 0 : i32
    return %c0_i32, %arg0 : i32, i32
  }
  func.func @transform_1(%arg0: i32) -> (i32, i32) {
    %c0_i32 = arith.constant 0 : i32
    %c0_i32_0 = arith.constant 0 : i32
    %c0_i32_1 = arith.constant 0 : i32
    return %c0_i32, %c0_i32_0 : i32, i32
  }
  func.func @transform_2(%arg0: i32) -> (i32, i32) {
    %c0_i32 = arith.constant 0 : i32
    %c0_i32_0 = arith.constant 0 : i32
    return %arg0, %c0_i32 : i32, i32
  }
}

</mosaic_0001>

<llo_original>
// kernel: tpu_custom_call.1
$region0: #{tpu_custom_call.1}
  #allocation0 [shape = 'u32[]', space=smem, size = 0x4, offset = 0x4, fixed_abs, tag = 'smem constant byte address 0x4 - core index']
  #allocation1 [shape = 'u32[72,128]{1,0:T(1,128)}', space=vmem, size = 0x9000, scoped, tag = 'internal scratch']
  %s0 = inlined_call_operand.vmem [shape: f32[16,16], index: 0, kind: input, shape index: {}]
  %s1 = inlined_call_operand.vmem [shape: f32[128,1], index: 1, kind: input, shape index: {}]
  %s2 = inlined_call_operand.hbm [shape: f32[16,128], index: 2, kind: output, shape index: {}]
  %s3 = sld [smem:[#allocation0]]
  $region18: #{tpu_custom_call.1} parent=0
    _
  %s5 = ssub.s32 1, %s3
  %s6 = scalar_select 0, %s5, %s3
  $region1: #{tpu_custom_call.1} parent=0
    #allocation2 [shape = 'u8[8192]{0}', space=vmem, size = 0x2000, scoped, tag = 'output window, operand 0, single buffered']
    #allocation3 [shape = 's32[1]{0}', space=sflag, size = 0x4, scoped, tag = 'scoped memory for tpu_custom_call.1']
    %7 = vsyncpa [#allocation3], 0
    // Predicated region
    $region2: #{tpu_custom_call.1} parent=1 // pred_check
      _
    $region3: #{tpu_custom_call.1} parent=1 // pred_check_branch
      %9 = sbr.rel (0) target = $region5
    $region4: #{tpu_custom_call.1} parent=1 // pred_region
      _
    $region5: #{tpu_custom_call.1} parent=1 // pred_fallthru
      _
    // Predicated region
    $region6: #{tpu_custom_call.1} parent=1 // pred_check
      _
    $region7: #{tpu_custom_call.1} parent=1 // pred_check_branch
      %11 = sbr.rel (0) target = $region9
    $region8: #{tpu_custom_call.1} parent=1 // pred_region
      _
    $region9: #{tpu_custom_call.1} parent=1 // pred_fallthru
      _
    %v12 = vld [vmem:[%s0] sm:$0xff]
    %v13 = vld [vmem:[%s0 + $0x8] sm:$0xff]
    %v14 = vrcp.pop %v12
    %v15 = vmul.f32 %v12, %v14
    %v16 = vsub.f32 1.0, %v15
    %v17 = vmul.f32 %v14, %v16
    %v18 = vadd.f32 %v14, %v17
    %vm19 = vweird.f32 %v12
    %vm20 = vweird.f32 %v14
    %vm21 = vmor %vm19, %vm20
    %v22 = vsel %vm21, %v14, %v18
    %v23 = vand.u32 2147483647, %v12
    %vm24 = vcmp.eq.f32.partialorder %v23, 8.507059e+37
    %v25 = vand.u32 %v12, 2147483648
    %v26 = vor.u32 1.1754944e-38, %v25
    %v27 = vsel %vm24, %v26, %v22
    %v28 = vrcp.pop %v13
    %v29 = vmul.f32 %v13, %v28
    %v30 = vsub.f32 1.0, %v29
    %v31 = vmul.f32 %v28, %v30
    %v32 = vadd.f32 %v28, %v31
    %vm33 = vweird.f32 %v13
    %vm34 = vweird.f32 %v28
    %vm35 = vmor %vm33, %vm34
    %v36 = vsel %vm35, %v28, %v32
    %v37 = vand.u32 2147483647, %v13
    %vm38 = vcmp.eq.f32.partialorder %v37, 8.507059e+37
    %v39 = vand.u32 %v13, 2147483648
    %v40 = vor.u32 1.1754944e-38, %v39
    %v41 = vsel %vm38, %v40, %v36
    %v42 = vmul.f32 %v27, 0.4
    %v43 = vmul.f32 %v41, 0.4
    %v46 = vrot.slane %v12, 1
    %v47 = vrot.slane %v12, 2
    %v48 = vrot.slane %v12, 3
    %v49 = vrot.slane %v12, 4
    %v50 = vrot.slane %v12, 5
    %v51 = vrot.slane %v12, 6
    %v52 = vrot.slane %v12, 7
    %v53 = vrot.slane %v13, 1
    %v54 = vrot.slane %v13, 2
    %v55 = vrot.slane %v13, 3
    %v56 = vrot.slane %v13, 4
    %v57 = vrot.slane %v13, 5
    %v58 = vrot.slane %v13, 6
    %v59 = vrot.slane %v13, 7
    %v60 = vperm.slane %v12, 0
    %v61 = vperm.slane %v46, 0
    %v62 = vperm.slane %v47, 0
    %v63 = vperm.slane %v48, 0
    %v64 = vperm.slane %v49, 0
    %v65 = vperm.slane %v50, 0
    %v66 = vperm.slane %v51, 0
    %v67 = vperm.slane %v52, 0
    %v68 = vperm.slane %v13, 0
    %v69 = vperm.slane %v53, 0
    %v70 = vperm.slane %v54, 0
    %v71 = vperm.slane %v55, 0
    %v72 = vperm.slane %v56, 0
    %v73 = vperm.slane %v57, 0
    %v74 = vperm.slane %v58, 0
    %v75 = vperm.slane %v59, 0
    %v94 = vrot.slane %v42, 1
    %v95 = vrot.slane %v42, 2
    %v96 = vrot.slane %v42, 3
    %v97 = vrot.slane %v42, 4
    %v98 = vrot.slane %v42, 5
    %v99 = vrot.slane %v42, 6
    %v100 = vrot.slane %v42, 7
    %v101 = vrot.slane %v43, 1
    %v102 = vrot.slane %v43, 2
    %v103 = vrot.slane %v43, 3
    %v104 = vrot.slane %v43, 4
    %v105 = vrot.slane %v43, 5
    %v106 = vrot.slane %v43, 6
    %v107 = vrot.slane %v43, 7
    %v108 = vperm.slane %v42, 0
    %v109 = vperm.slane %v94, 0
    %v110 = vperm.slane %v95, 0
    %v111 = vperm.slane %v96, 0
    %v112 = vperm.slane %v97, 0
    %v113 = vperm.slane %v98, 0
    %v114 = vperm.slane %v99, 0
    %v115 = vperm.slane %v100, 0
    %v116 = vperm.slane %v43, 0
    %v117 = vperm.slane %v101, 0
    %v118 = vperm.slane %v102, 0
    %v119 = vperm.slane %v103, 0
    %v120 = vperm.slane %v104, 0
    %v121 = vperm.slane %v105, 0
    %v122 = vperm.slane %v106, 0
    %v123 = vperm.slane %v107, 0
    %v140 = vld [vmem:[%s1] sm:$0xff]
    %v141 = vld [vmem:[%s1 + $0x8] sm:$0xff]
    %v142 = vld [vmem:[%s1 + $0x10] sm:$0xff]
    %v143 = vld [vmem:[%s1 + $0x18] sm:$0xff]
    %v144 = vld [vmem:[%s1 + $0x20] sm:$0xff]
    %v145 = vld [vmem:[%s1 + $0x28] sm:$0xff]
    %v146 = vld [vmem:[%s1 + $0x30] sm:$0xff]
    %v147 = vld [vmem:[%s1 + $0x38] sm:$0xff]
    %v148 = vld [vmem:[%s1 + $0x40] sm:$0xff]
    %v149 = vld [vmem:[%s1 + $0x48] sm:$0xff]
    %v150 = vld [vmem:[%s1 + $0x50] sm:$0xff]
    %v151 = vld [vmem:[%s1 + $0x58] sm:$0xff]
    %v152 = vld [vmem:[%s1 + $0x60] sm:$0xff]
    %v153 = vld [vmem:[%s1 + $0x68] sm:$0xff]
    %v154 = vld [vmem:[%s1 + $0x70] sm:$0xff]
    %v155 = vld [vmem:[%s1 + $0x78] sm:$0xff]
    %157 = vset.pattern.permute.xlu0 0
    %158 = vperm.xlu0 %157, %v140
    %v159 = vpop.permute.xlu0 %158
    %162 = vset.pattern.permute.xlu0 0
    %163 = vperm.xlu0 %162, %v141
    %v164 = vpop.permute.xlu0 %163
    %167 = vset.pattern.permute.xlu0 0
    %168 = vperm.xlu0 %167, %v142
    %v169 = vpop.permute.xlu0 %168
    %172 = vset.pattern.permute.xlu0 0
    %173 = vperm.xlu0 %172, %v143
    %v174 = vpop.permute.xlu0 %173
    %177 = vset.pattern.permute.xlu0 0
    %178 = vperm.xlu0 %177, %v144
    %v179 = vpop.permute.xlu0 %178
    %182 = vset.pattern.permute.xlu0 0
    %183 = vperm.xlu0 %182, %v145
    %v184 = vpop.permute.xlu0 %183
    %187 = vset.pattern.permute.xlu0 0
    %188 = vperm.xlu0 %187, %v146
    %v189 = vpop.permute.xlu0 %188
    %192 = vset.pattern.permute.xlu0 0
    %193 = vperm.xlu0 %192, %v147
    %v194 = vpop.permute.xlu0 %193
    %197 = vset.pattern.permute.xlu0 0
    %198 = vperm.xlu0 %197, %v148
    %v199 = vpop.permute.xlu0 %198
    %202 = vset.pattern.permute.xlu0 0
    %203 = vperm.xlu0 %202, %v149
    %v204 = vpop.permute.xlu0 %203
    %207 = vset.pattern.permute.xlu0 0
    %208 = vperm.xlu0 %207, %v150
    %v209 = vpop.permute.xlu0 %208
    %212 = vset.pattern.permute.xlu0 0
    %213 = vperm.xlu0 %212, %v151
    %v214 = vpop.permute.xlu0 %213
    %217 = vset.pattern.permute.xlu0 0
    %218 = vperm.xlu0 %217, %v152
    %v219 = vpop.permute.xlu0 %218
    %222 = vset.pattern.permute.xlu0 0
    %223 = vperm.xlu0 %222, %v153
    %v224 = vpop.permute.xlu0 %223
    %227 = vset.pattern.permute.xlu0 0
    %228 = vperm.xlu0 %227, %v154
    %v229 = vpop.permute.xlu0 %228
    %232 = vset.pattern.permute.xlu0 0
    %233 = vperm.xlu0 %232, %v155
    %v234 = vpop.permute.xlu0 %233
    %v236 = vmul.f32 %v159, %v60
    %v237 = vmul.f32 %v164, %v61
    %v238 = vmul.f32 %v169, %v62
    %v239 = vmul.f32 %v174, %v63
    %v240 = vmul.f32 %v179, %v64
    %v241 = vmul.f32 %v184, %v65
    %v242 = vmul.f32 %v189, %v66
    %v243 = vmul.f32 %v194, %v67
    %v244 = vmul.f32 %v199, %v68
    %v245 = vmul.f32 %v204, %v69
    %v246 = vmul.f32 %v209, %v70
    %v247 = vmul.f32 %v214, %v71
    %v248 = vmul.f32 %v219, %v72
    %v249 = vmul.f32 %v224, %v73
    %v250 = vmul.f32 %v229, %v74
    %v251 = vmul.f32 %v234, %v75
    %v252 = vand.u32 2147483647, %v236
    %vm253 = vcmp.le.f32.partialorder %v252, 0.7853982
    %vm254 = vcmp.lt.s32.totalorder %v236, 0
    %v255 = vand.u32 %v236, 2139095040
    %v256 = vshrl.u32 %v255, 23
    %v257 = vsub.s32 %v256, 127
    %v258 = vand.u32 2147483647, %v236
    %v259 = vand.u32 %v258, 8388607
    %v260 = vor.u32 %v259, 8388608
    %v261 = vsub.s32 0, %v260
    %v262 = vadd.s32 %v257, 1
    %vm263 = vcmp.gt.s32.totalorder %v262, 0
    %v264 = vsel %vm263, %v262, 0
    %v265 = vshrl.u32 %v264, 5
    %v266 = vand.u32 %v264, 31
    %v267 = vsub.s32 32, %v266
    %v268 = vshrl.u32 683565275, %v267
    %v269 = vshll.u32 683565275, %v266
    %v270 = vshrl.u32 2475754826, %v267
    %v271 = vor.u32 %v269, %v270
    %v272 = vshll.u32 2475754826, %v266
    %v273 = vshrl.u32 2131351028, %v267
    %v274 = vor.u32 %v272, %v273
    %v275 = vshll.u32 2131351028, %v266
    %v276 = vshrl.u32 2102212464, %v267
    %v277 = vor.u32 %v275, %v276
    %v278 = vshll.u32 2102212464, %v266
    %v279 = vshrl.u32 920167782, %v267
    %v280 = vor.u32 %v278, %v279
    %v281 = vshll.u32 920167782, %v266
    %v282 = vshrl.u32 1326507024, %v267
    %v283 = vor.u32 %v281, %v282
    %vm284 = vcmp.lt.s32.totalorder %v265, 1
    %vm285 = vcmp.lt.s32.totalorder %v265, 2
    %vm286 = vcmp.lt.s32.totalorder %v265, 3
    %vm287 = vcmp.lt.s32.totalorder %v265, 4
    %v288 = vsel %vm284, %v268, %v271
    %v289 = vsel %vm287, %v277, 2102212464
    %v290 = vsel %vm286, %v274, %v289
    %v291 = vsel %vm285, %v288, %v290
    %v292 = vsel %vm284, %v271, %v274
    %v293 = vsel %vm287, %v280, 920167782
    %v294 = vsel %vm286, %v277, %v293
    %v295 = vsel %vm285, %v292, %v294
    %v296 = vsel %vm284, %v274, %v277
    %v297 = vsel %vm287, %v283, 1326507024
    %v298 = vsel %vm286, %v280, %v297
    %v299 = vsel %vm285, %v296, %v298
    %v300 = vshll.u32 %v260, 8
    %v301 = vand.u32 %v300, 65535
    %v302 = vshrl.u32 %v300, 16
    %v303 = vand.u32 %v299, 65535
    %v304 = vshrl.u32 %v299, 16
    %v305 = vmul.u32 %v301, %v303
    %v306 = vmul.u32 %v301, %v304
    %v307 = vmul.u32 %v302, %v303
    %v308 = vmul.u32 %v302, %v304
    %v309 = vshll.u32 %v306, 16
    %v310 = vshrl.u32 %v306, 16
    %v311 = vshll.u32 %v307, 16
    %v312 = vshrl.u32 %v307, 16
    %vm313 = vc.u32 %v305, %v309
    %v314 = vsel %vm313, 1, 0
    %v315 = vadd.s32 %v305, %v309
    %v316 = vadd.s32 %v308, %v314
    %vm317 = vc.u32 %v315, %v311
    %v318 = vsel %vm317, 1, 0
    %v319 = vadd.s32 %v315, %v311
    %v320 = vadd.s32 %v316, %v318
    %v321 = vadd.s32 %v320, %v310
    %v322 = vadd.s32 %v321, %v312
    %v323 = vand.u32 %v300, 65535
    %v324 = vshrl.u32 %v300, 16
    %v325 = vand.u32 %v295, 65535
    %v326 = vshrl.u32 %v295, 16
    %v327 = vmul.u32 %v323, %v325
    %v328 = vmul.u32 %v323, %v326
    %v329 = vmul.u32 %v324, %v325
    %v330 = vmul.u32 %v324, %v326
    %v331 = vshll.u32 %v328, 16
    %v332 = vshrl.u32 %v328, 16
    %v333 = vshll.u32 %v329, 16
    %v334 = vshrl.u32 %v329, 16
    %vm335 = vc.u32 %v327, %v331
    %v336 = vsel %vm335, 1, 0
    %v337 = vadd.s32 %v327, %v331
    %v338 = vadd.s32 %v330, %v336
    %vm339 = vc.u32 %v337, %v333
    %v340 = vsel %vm339, 1, 0
    %v341 = vadd.s32 %v337, %v333
    %v342 = vadd.s32 %v338, %v340
    %v343 = vadd.s32 %v342, %v332
    %v344 = vadd.s32 %v343, %v334
    %v345 = vmul.u32 %v300, %v291
    %v346 = vadd.s32 %v322, %v341
    %vm347 = vc.u32 %v322, %v341
    %v348 = vadd.s32 %v344, 1
    %v349 = vsel %vm347, %v348, %v344
    %v350 = vadd.s32 %v345, %v349
    %v351 = vadd.s32 %v350, 536870912
    %v352 = vshrl.u32 %v351, 30
    %v353 = vshll.u32 %v352, 30
    %v354 = vsub.s32 %v350, %v353
    %vm355 = vcmp.lt.s32.totalorder %v354, 0
    %v356 = vsub.s32 0, %v354
    %v357 = vsel %vm355, %v356, %v354
    %v358 = vclz %v357
    %v359 = vsub.s32 %v358, 2
    %vm360 = vcmp.gt.s32.totalorder 0, %v359
    %v361 = vsel %vm360, 0, %v359
    %v362 = vsub.s32 32, %v361
    %v363 = vshll.u32 %v354, %v361
    %v364 = vshrl.u32 %v346, %v362
    %v365 = vor.u32 %v363, %v364
    %v366 = vsub.s32 4294967266, %v361
    %v367 = vadd.s32 %v366, 127
    %v368 = vshll.u32 %v367, 23
    %v369 = vor.u32 4788187, %v368
    %v370 = vand.u32 2147483647, %v369
    %v372 = vcvt.s32.f32 %v365
    %v373 = vmul.f32 %v372, %v370
    %v374 = vxor.u32 %v373, 2147483648
    %v375 = vsel %vm254, %v374, %v373
    %v376 = vsub.s32 4, %v352
    %v377 = vsel %vm254, %v376, %v352
    %v378 = vsel %vm253, %v236, %v375
    %v379 = vsel %vm253, 0, %v377
    %v380 = vmul.f32 %v378, %v378
    %v381 = vmul.f32 %v380, -0.001358992
    %v382 = vadd.f32 %v381, 0.041655596
    %v383 = vmul.f32 %v380, %v382
    %v384 = vadd.f32 %v383, -0.4999988
    %v385 = vmul.f32 %v380, %v384
    %v386 = vadd.f32 1.0, %v385
    %v387 = vmul.f32 %v378, %v378
    %v388 = vmul.f32 %v387, -0.00019511016
    %v389 = vadd.f32 %v388, 0.008332121
    %v390 = vmul.f32 %v387, %v389
    %v391 = vadd.f32 %v390, -0.16666654
    %v392 = vmul.f32 %v387, %v391
    %v393 = vadd.f32 %v392, 1.0
    %v394 = vmul.f32 %v393, %v378
    %vm395 = vweird.f32 %v236
    %v396 = vadd.s32 %v379, 3
    %v397 = vand.u32 %v396, 3
    %vm398 = vcmp.lt.s32.totalorder %v397, 2
    %vm399 = vcmp.eq.s32.totalorder %v397, 0
    %v400 = vxor.u32 %v394, 2147483648
    %v401 = vsel %vm399, %v386, %v400
    %vm402 = vcmp.eq.s32.totalorder %v397, 2
    %v403 = vxor.u32 %v386, 2147483648
    %v404 = vsel %vm402, %v403, %v394
    %v405 = vsel %vm398, %v401, %v404
    %v406 = vsel %vm395, nan, %v405
    %v407 = vand.u32 2147483647, %v237
    %vm408 = vcmp.le.f32.partialorder %v407, 0.7853982
    %vm409 = vcmp.lt.s32.totalorder %v237, 0
    %v410 = vand.u32 %v237, 2139095040
    %v411 = vshrl.u32 %v410, 23
    %v412 = vsub.s32 %v411, 127
    %v413 = vand.u32 2147483647, %v237
    %v414 = vand.u32 %v413, 8388607
    %v415 = vor.u32 %v414, 8388608
    %v416 = vsub.s32 0, %v415
    %v417 = vadd.s32 %v412, 1
    %vm418 = vcmp.gt.s32.totalorder %v417, 0
    %v419 = vsel %vm418, %v417, 0
    %v420 = vshrl.u32 %v419, 5
    %v421 = vand.u32 %v419, 31
    %v422 = vsub.s32 32, %v421
    %v423 = vshrl.u32 683565275, %v422
    %v424 = vshll.u32 683565275, %v421
    %v425 = vshrl.u32 2475754826, %v422
    %v426 = vor.u32 %v424, %v425
    %v427 = vshll.u32 2475754826, %v421
    %v428 = vshrl.u32 2131351028, %v422
    %v429 = vor.u32 %v427, %v428
    %v430 = vshll.u32 2131351028, %v421
    %v431 = vshrl.u32 2102212464, %v422
    %v432 = vor.u32 %v430, %v431
    %v433 = vshll.u32 2102212464, %v421
    %v434 = vshrl.u32 920167782, %v422
    %v435 = vor.u32 %v433, %v434
    %v436 = vshll.u32 920167782, %v421
    %v437 = vshrl.u32 1326507024, %v422
    %v438 = vor.u32 %v436, %v437
    %vm439 = vcmp.lt.s32.totalorder %v420, 1
    %vm440 = vcmp.lt.s32.totalorder %v420, 2
    %vm441 = vcmp.lt.s32.totalorder %v420, 3
    %vm442 = vcmp.lt.s32.totalorder %v420, 4
    %v443 = vsel %vm439, %v423, %v426
    %v444 = vsel %vm442, %v432, 2102212464
    %v445 = vsel %vm441, %v429, %v444
    %v446 = vsel %vm440, %v443, %v445
    %v447 = vsel %vm439, %v426, %v429
    %v448 = vsel %vm442, %v435, 920167782
    %v449 = vsel %vm441, %v432, %v448
    %v450 = vsel %vm440, %v447, %v449
    %v451 = vsel %vm439, %v429, %v432
    %v452 = vsel %vm442, %v438, 1326507024
    %v453 = vsel %vm441, %v435, %v452
    %v454 = vsel %vm440, %v451, %v453
    %v455 = vshll.u32 %v415, 8
    %v456 = vand.u32 %v455, 65535
    %v457 = vshrl.u32 %v455, 16
    %v458 = vand.u32 %v454, 65535
    %v459 = vshrl.u32 %v454, 16
    %v460 = vmul.u32 %v456, %v458
    %v461 = vmul.u32 %v456, %v459
    %v462 = vmul.u32 %v457, %v458
    %v463 = vmul.u32 %v457, %v459
    %v464 = vshll.u32 %v461, 16
    %v465 = vshrl.u32 %v461, 16
    %v466 = vshll.u32 %v462, 16
    %v467 = vshrl.u32 %v462, 16
    %vm468 = vc.u32 %v460, %v464
    %v469 = vsel %vm468, 1, 0
    %v470 = vadd.s32 %v460, %v464
    %v471 = vadd.s32 %v463, %v469
    %vm472 = vc.u32 %v470, %v466
    %v473 = vsel %vm472, 1, 0
    %v474 = vadd.s32 %v470, %v466
    %v475 = vadd.s32 %v471, %v473
    %v476 = vadd.s32 %v475, %v465
    %v477 = vadd.s32 %v476, %v467
    %v478 = vand.u32 %v455, 65535
    %v479 = vshrl.u32 %v455, 16
    %v480 = vand.u32 %v450, 65535
    %v481 = vshrl.u32 %v450, 16
    %v482 = vmul.u32 %v478, %v480
    %v483 = vmul.u32 %v478, %v481
    %v484 = vmul.u32 %v479, %v480
    %v485 = vmul.u32 %v479, %v481
    %v486 = vshll.u32 %v483, 16
    %v487 = vshrl.u32 %v483, 16
    %v488 = vshll.u32 %v484, 16
    %v489 = vshrl.u32 %v484, 16
    %vm490 = vc.u32 %v482, %v486
    %v491 = vsel %vm490, 1, 0
    %v492 = vadd.s32 %v482, %v486
    %v493 = vadd.s32 %v485, %v491
    %vm494 = vc.u32 %v492, %v488
    %v495 = vsel %vm494, 1, 0
    %v496 = vadd.s32 %v492, %v488
    %v497 = vadd.s32 %v493, %v495
    %v498 = vadd.s32 %v497, %v487
    %v499 = vadd.s32 %v498, %v489
    %v500 = vmul.u32 %v455, %v446
    %v501 = vadd.s32 %v477, %v496
    %vm502 = vc.u32 %v477, %v496
    %v503 = vadd.s32 %v499, 1
    %v504 = vsel %vm502, %v503, %v499
    %v505 = vadd.s32 %v500, %v504
    %v506 = vadd.s32 %v505, 536870912
    %v507 = vshrl.u32 %v506, 30
    %v508 = vshll.u32 %v507, 30
    %v509 = vsub.s32 %v505, %v508
    %vm510 = vcmp.lt.s32.totalorder %v509, 0
    %v511 = vsub.s32 0, %v509
    %v512 = vsel %vm510, %v511, %v509
    %v513 = vclz %v512
    %v514 = vsub.s32 %v513, 2
    %vm515 = vcmp.gt.s32.totalorder 0, %v514
    %v516 = vsel %vm515, 0, %v514
    %v517 = vsub.s32 32, %v516
    %v518 = vshll.u32 %v509, %v516
    %v519 = vshrl.u32 %v501, %v517
    %v520 = vor.u32 %v518, %v519
    %v521 = vsub.s32 4294967266, %v516
    %v522 = vadd.s32 %v521, 127
    %v523 = vshll.u32 %v522, 23
    %v524 = vor.u32 4788187, %v523
    %v525 = vand.u32 2147483647, %v524
    %v527 = vcvt.s32.f32 %v520
    %v528 = vmul.f32 %v527, %v525
    %v529 = vxor.u32 %v528, 2147483648
    %v530 = vsel %vm409, %v529, %v528
    %v531 = vsub.s32 4, %v507
    %v532 = vsel %vm409, %v531, %v507
    %v533 = vsel %vm408, %v237, %v530
    %v534 = vsel %vm408, 0, %v532
    %v535 = vmul.f32 %v533, %v533
    %v536 = vmul.f32 %v535, -0.001358992
    %v537 = vadd.f32 %v536, 0.041655596
    %v538 = vmul.f32 %v535, %v537
    %v539 = vadd.f32 %v538, -0.4999988
    %v540 = vmul.f32 %v535, %v539
    %v541 = vadd.f32 1.0, %v540
    %v542 = vmul.f32 %v533, %v533
    %v543 = vmul.f32 %v542, -0.00019511016
    %v544 = vadd.f32 %v543, 0.008332121
    %v545 = vmul.f32 %v542, %v544
    %v546 = vadd.f32 %v545, -0.16666654
    %v547 = vmul.f32 %v542, %v546
    %v548 = vadd.f32 %v547, 1.0
    %v549 = vmul.f32 %v548, %v533
    %vm550 = vweird.f32 %v237
    %v551 = vadd.s32 %v534, 3
    %v552 = vand.u32 %v551, 3
    %vm553 = vcmp.lt.s32.totalorder %v552, 2
    %vm554 = vcmp.eq.s32.totalorder %v552, 0
    %v555 = vxor.u32 %v549, 2147483648
    %v556 = vsel %vm554, %v541, %v555
    %vm557 = vcmp.eq.s32.totalorder %v552, 2
    %v558 = vxor.u32 %v541, 2147483648
    %v559 = vsel %vm557, %v558, %v549
    %v560 = vsel %vm553, %v556, %v559
    %v561 = vsel %vm550, nan, %v560
    %v562 = vand.u32 2147483647, %v238
    %vm563 = vcmp.le.f32.partialorder %v562, 0.7853982
    %vm564 = vcmp.lt.s32.totalorder %v238, 0
    %v565 = vand.u32 %v238, 2139095040
    %v566 = vshrl.u32 %v565, 23
    %v567 = vsub.s32 %v566, 127
    %v568 = vand.u32 2147483647, %v238
    %v569 = vand.u32 %v568, 8388607
    %v570 = vor.u32 %v569, 8388608
    %v571 = vsub.s32 0, %v570
    %v572 = vadd.s32 %v567, 1
    %vm573 = vcmp.gt.s32.totalorder %v572, 0
    %v574 = vsel %vm573, %v572, 0
    %v575 = vshrl.u32 %v574, 5
    %v576 = vand.u32 %v574, 31
    %v577 = vsub.s32 32, %v576
    %v578 = vshrl.u32 683565275, %v577
    %v579 = vshll.u32 683565275, %v576
    %v580 = vshrl.u32 2475754826, %v577
    %v581 = vor.u32 %v579, %v580
    %v582 = vshll.u32 2475754826, %v576
    %v583 = vshrl.u32 2131351028, %v577
    %v584 = vor.u32 %v582, %v583
    %v585 = vshll.u32 2131351028, %v576
    %v586 = vshrl.u32 2102212464, %v577
    %v587 = vor.u32 %v585, %v586
    %v588 = vshll.u32 2102212464, %v576
    %v589 = vshrl.u32 920167782, %v577
    %v590 = vor.u32 %v588, %v589
    %v591 = vshll.u32 920167782, %v576
    %v592 = vshrl.u32 1326507024, %v577
    %v593 = vor.u32 %v591, %v592
    %vm594 = vcmp.lt.s32.totalorder %v575, 1
    %vm595 = vcmp.lt.s32.totalorder %v575, 2
    %vm596 = vcmp.lt.s32.totalorder %v575, 3
    %vm597 = vcmp.lt.s32.totalorder %v575, 4
    %v598 = vsel %vm594, %v578, %v581
    %v599 = vsel %vm597, %v587, 2102212464
    %v600 = vsel %vm596, %v584, %v599
    %v601 = vsel %vm595, %v598, %v600
    %v602 = vsel %vm594, %v581, %v584
    %v603 = vsel %vm597, %v590, 920167782
    %v604 = vsel %vm596, %v587, %v603
    %v605 = vsel %vm595, %v602, %v604
    %v606 = vsel %vm594, %v584, %v587
    %v607 = vsel %vm597, %v593, 1326507024
    %v608 = vsel %vm596, %v590, %v607
    %v609 = vsel %vm595, %v606, %v608
    %v610 = vshll.u32 %v570, 8
    %v611 = vand.u32 %v610, 65535
    %v612 = vshrl.u32 %v610, 16
    %v613 = vand.u32 %v609, 65535
    %v614 = vshrl.u32 %v609, 16
    %v615 = vmul.u32 %v611, %v613
    %v616 = vmul.u32 %v611, %v614
    %v617 = vmul.u32 %v612, %v613
    %v618 = vmul.u32 %v612, %v614
    %v619 = vshll.u32 %v616, 16
    %v620 = vshrl.u32 %v616, 16
    %v621 = vshll.u32 %v617, 16
    %v622 = vshrl.u32 %v617, 16
    %vm623 = vc.u32 %v615, %v619
    %v624 = vsel %vm623, 1, 0
    %v625 = vadd.s32 %v615, %v619
    %v626 = vadd.s32 %v618, %v624
    %vm627 = vc.u32 %v625, %v621
    %v628 = vsel %vm627, 1, 0
    %v629 = vadd.s32 %v625, %v621
    %v630 = vadd.s32 %v626, %v628
    %v631 = vadd.s32 %v630, %v620
    %v632 = vadd.s32 %v631, %v622
    %v633 = vand.u32 %v610, 65535
    %v634 = vshrl.u32 %v610, 16
    %v635 = vand.u32 %v605, 65535
    %v636 = vshrl.u32 %v605, 16
    %v637 = vmul.u32 %v633, %v635
    %v638 = vmul.u32 %v633, %v636
    %v639 = vmul.u32 %v634, %v635
    %v640 = vmul.u32 %v634, %v636
    %v641 = vshll.u32 %v638, 16
    %v642 = vshrl.u32 %v638, 16
    %v643 = vshll.u32 %v639, 16
    %v644 = vshrl.u32 %v639, 16
    %vm645 = vc.u32 %v637, %v641
    %v646 = vsel %vm645, 1, 0
    %v647 = vadd.s32 %v637, %v641
    %v648 = vadd.s32 %v640, %v646
    %vm649 = vc.u32 %v647, %v643
    %v650 = vsel %vm649, 1, 0
    %v651 = vadd.s32 %v647, %v643
    %v652 = vadd.s32 %v648, %v650
    %v653 = vadd.s32 %v652, %v642
    %v654 = vadd.s32 %v653, %v644
    %v655 = vmul.u32 %v610, %v601
    %v656 = vadd.s32 %v632, %v651
    %vm657 = vc.u32 %v632, %v651
    %v658 = vadd.s32 %v654, 1
    %v659 = vsel %vm657, %v658, %v654
    %v660 = vadd.s32 %v655, %v659
    %v661 = vadd.s32 %v660, 536870912
    %v662 = vshrl.u32 %v661, 30
    %v663 = vshll.u32 %v662, 30
    %v664 = vsub.s32 %v660, %v663
    %vm665 = vcmp.lt.s32.totalorder %v664, 0
    %v666 = vsub.s32 0, %v664
    %v667 = vsel %vm665, %v666, %v664
    %v668 = vclz %v667
    %v669 = vsub.s32 %v668, 2
    %vm670 = vcmp.gt.s32.totalorder 0, %v669
    %v671 = vsel %vm670, 0, %v669
    %v672 = vsub.s32 32, %v671
    %v673 = vshll.u32 %v664, %v671
    %v674 = vshrl.u32 %v656, %v672
    %v675 = vor.u32 %v673, %v674
    %v676 = vsub.s32 4294967266, %v671
    %v677 = vadd.s32 %v676, 127
    %v678 = vshll.u32 %v677, 23
    %v679 = vor.u32 4788187, %v678
    %v680 = vand.u32 2147483647, %v679
    %v682 = vcvt.s32.f32 %v675
    %v683 = vmul.f32 %v682, %v680
    %v684 = vxor.u32 %v683, 2147483648
    %v685 = vsel %vm564, %v684, %v683
    %v686 = vsub.s32 4, %v662
    %v687 = vsel %vm564, %v686, %v662
    %v688 = vsel %vm563, %v238, %v685
    %v689 = vsel %vm563, 0, %v687
    %v690 = vmul.f32 %v688, %v688
    %v691 = vmul.f32 %v690, -0.001358992
    %v692 = vadd.f32 %v691, 0.041655596
    %v693 = vmul.f32 %v690, %v692
    %v694 = vadd.f32 %v693, -0.4999988
    %v695 = vmul.f32 %v690, %v694
    %v696 = vadd.f32 1.0, %v695
    %v697 = vmul.f32 %v688, %v688
    %v698 = vmul.f32 %v697, -0.00019511016
    %v699 = vadd.f32 %v698, 0.008332121
    %v700 = vmul.f32 %v697, %v699
    %v701 = vadd.f32 %v700, -0.16666654
    %v702 = vmul.f32 %v697, %v701
    %v703 = vadd.f32 %v702, 1.0
    %v704 = vmul.f32 %v703, %v688
    %vm705 = vweird.f32 %v238
    %v706 = vadd.s32 %v689, 3
    %v707 = vand.u32 %v706, 3
    %vm708 = vcmp.lt.s32.totalorder %v707, 2
    %vm709 = vcmp.eq.s32.totalorder %v707, 0
    %v710 = vxor.u32 %v704, 2147483648
    %v711 = vsel %vm709, %v696, %v710
    %vm712 = vcmp.eq.s32.totalorder %v707, 2
    %v713 = vxor.u32 %v696, 2147483648
    %v714 = vsel %vm712, %v713, %v704
    %v715 = vsel %vm708, %v711, %v714
    %v716 = vsel %vm705, nan, %v715
    %v717 = vand.u32 2147483647, %v239
    %vm718 = vcmp.le.f32.partialorder %v717, 0.7853982
    %vm719 = vcmp.lt.s32.totalorder %v239, 0
    %v720 = vand.u32 %v239, 2139095040
    %v721 = vshrl.u32 %v720, 23
    %v722 = vsub.s32 %v721, 127
    %v723 = vand.u32 2147483647, %v239
    %v724 = vand.u32 %v723, 8388607
    %v725 = vor.u32 %v724, 8388608
    %v726 = vsub.s32 0, %v725
    %v727 = vadd.s32 %v722, 1
    %vm728 = vcmp.gt.s32.totalorder %v727, 0
    %v729 = vsel %vm728, %v727, 0
    %v730 = vshrl.u32 %v729, 5
    %v731 = vand.u32 %v729, 31
    %v732 = vsub.s32 32, %v731
    %v733 = vshrl.u32 683565275, %v732
    %v734 = vshll.u32 683565275, %v731
    %v735 = vshrl.u32 2475754826, %v732
    %v736 = vor.u32 %v734, %v735
    %v737 = vshll.u32 2475754826, %v731
    %v738 = vshrl.u32 2131351028, %v732
    %v739 = vor.u32 %v737, %v738
    %v740 = vshll.u32 2131351028, %v731
    %v741 = vshrl.u32 2102212464, %v732
    %v742 = vor.u32 %v740, %v741
    %v743 = vshll.u32 2102212464, %v731
    %v744 = vshrl.u32 920167782, %v732
    %v745 = vor.u32 %v743, %v744
    %v746 = vshll.u32 920167782, %v731
    %v747 = vshrl.u32 1326507024, %v732
    %v748 = vor.u32 %v746, %v747
    %vm749 = vcmp.lt.s32.totalorder %v730, 1
    %vm750 = vcmp.lt.s32.totalorder %v730, 2
    %vm751 = vcmp.lt.s32.totalorder %v730, 3
    %vm752 = vcmp.lt.s32.totalorder %v730, 4
    %v753 = vsel %vm749, %v733, %v736
    %v754 = vsel %vm752, %v742, 2102212464
    %v755 = vsel %vm751, %v739, %v754
    %v756 = vsel %vm750, %v753, %v755
    %v757 = vsel %vm749, %v736, %v739
    %v758 = vsel %vm752, %v745, 920167782
    %v759 = vsel %vm751, %v742, %v758
    %v760 = vsel %vm750, %v757, %v759
    %v761 = vsel %vm749, %v739, %v742
    %v762 = vsel %vm752, %v748, 1326507024
    %v763 = vsel %vm751, %v745, %v762
    %v764 = vsel %vm750, %v761, %v763
    %v765 = vshll.u32 %v725, 8
    %v766 = vand.u32 %v765, 65535
    %v767 = vshrl.u32 %v765, 16
    %v768 = vand.u32 %v764, 65535
    %v769 = vshrl.u32 %v764, 16
    %v770 = vmul.u32 %v766, %v768
    %v771 = vmul.u32 %v766, %v769
    %v772 = vmul.u32 %v767, %v768
    %v773 = vmul.u32 %v767, %v769
    %v774 = vshll.u32 %v771, 16
    %v775 = vshrl.u32 %v771, 16
    %v776 = vshll.u32 %v772, 16
    %v777 = vshrl.u32 %v772, 16
    %vm778 = vc.u32 %v770, %v774
    %v779 = vsel %vm778, 1, 0
    %v780 = vadd.s32 %v770, %v774
    %v781 = vadd.s32 %v773, %v779
    %vm782 = vc.u32 %v780, %v776
    %v783 = vsel %vm782, 1, 0
    %v784 = vadd.s32 %v780, %v776
    %v785 = vadd.s32 %v781, %v783
    %v786 = vadd.s32 %v785, %v775
    %v787 = vadd.s32 %v786, %v777
    %v788 = vand.u32 %v765, 65535
    %v789 = vshrl.u32 %v765, 16
    %v790 = vand.u32 %v760, 65535
    %v791 = vshrl.u32 %v760, 16
    %v792 = vmul.u32 %v788, %v790
    %v793 = vmul.u32 %v788, %v791
    %v794 = vmul.u32 %v789, %v790
    %v795 = vmul.u32 %v789, %v791
    %v796 = vshll.u32 %v793, 16
    %v797 = vshrl.u32 %v793, 16
    %v798 = vshll.u32 %v794, 16
    %v799 = vshrl.u32 %v794, 16
    %vm800 = vc.u32 %v792, %v796
    %v801 = vsel %vm800, 1, 0
    %v802 = vadd.s32 %v792, %v796
    %v803 = vadd.s32 %v795, %v801
    %vm804 = vc.u32 %v802, %v798
    %v805 = vsel %vm804, 1, 0
    %v806 = vadd.s32 %v802, %v798
    %v807 = vadd.s32 %v803, %v805
    %v808 = vadd.s32 %v807, %v797
    %v809 = vadd.s32 %v808, %v799
    %v810 = vmul.u32 %v765, %v756
    %v811 = vadd.s32 %v787, %v806
    %vm812 = vc.u32 %v787, %v806
    %v813 = vadd.s32 %v809, 1
    %v814 = vsel %vm812, %v813, %v809
    %v815 = vadd.s32 %v810, %v814
    %v816 = vadd.s32 %v815, 536870912
    %v817 = vshrl.u32 %v816, 30
    %v818 = vshll.u32 %v817, 30
    %v819 = vsub.s32 %v815, %v818
    %vm820 = vcmp.lt.s32.totalorder %v819, 0
    %v821 = vsub.s32 0, %v819
    %v822 = vsel %vm820, %v821, %v819
    %v823 = vclz %v822
    %v824 = vsub.s32 %v823, 2
    %vm825 = vcmp.gt.s32.totalorder 0, %v824
    %v826 = vsel %vm825, 0, %v824
    %v827 = vsub.s32 32, %v826
    %v828 = vshll.u32 %v819, %v826
    %v829 = vshrl.u32 %v811, %v827
    %v830 = vor.u32 %v828, %v829
    %v831 = vsub.s32 4294967266, %v826
    %v832 = vadd.s32 %v831, 127
    %v833 = vshll.u32 %v832, 23
    %v834 = vor.u32 4788187, %v833
    %v835 = vand.u32 2147483647, %v834
    %v837 = vcvt.s32.f32 %v830
    %v838 = vmul.f32 %v837, %v835
    %v839 = vxor.u32 %v838, 2147483648
    %v840 = vsel %vm719, %v839, %v838
    %v841 = vsub.s32 4, %v817
    %v842 = vsel %vm719, %v841, %v817
    %v843 = vsel %vm718, %v239, %v840
    %v844 = vsel %vm718, 0, %v842
    %v845 = vmul.f32 %v843, %v843
    %v846 = vmul.f32 %v845, -0.001358992
    %v847 = vadd.f32 %v846, 0.041655596
    %v848 = vmul.f32 %v845, %v847
    %v849 = vadd.f32 %v848, -0.4999988
    %v850 = vmul.f32 %v845, %v849
    %v851 = vadd.f32 1.0, %v850
    %v852 = vmul.f32 %v843, %v843
    %v853 = vmul.f32 %v852, -0.00019511016
    %v854 = vadd.f32 %v853, 0.008332121
    %v855 = vmul.f32 %v852, %v854
    %v856 = vadd.f32 %v855, -0.16666654
    %v857 = vmul.f32 %v852, %v856
    %v858 = vadd.f32 %v857, 1.0
    %v859 = vmul.f32 %v858, %v843
    %vm860 = vweird.f32 %v239
    %v861 = vadd.s32 %v844, 3
    %v862 = vand.u32 %v861, 3
    %vm863 = vcmp.lt.s32.totalorder %v862, 2
    %vm864 = vcmp.eq.s32.totalorder %v862, 0
    %v865 = vxor.u32 %v859, 2147483648
    %v866 = vsel %vm864, %v851, %v865
    %vm867 = vcmp.eq.s32.totalorder %v862, 2
    %v868 = vxor.u32 %v851, 2147483648
    %v869 = vsel %vm867, %v868, %v859
    %v870 = vsel %vm863, %v866, %v869
    %v871 = vsel %vm860, nan, %v870
    %v872 = vand.u32 2147483647, %v240
    %vm873 = vcmp.le.f32.partialorder %v872, 0.7853982
    %vm874 = vcmp.lt.s32.totalorder %v240, 0
    %v875 = vand.u32 %v240, 2139095040
    %v876 = vshrl.u32 %v875, 23
    %v877 = vsub.s32 %v876, 127
    %v878 = vand.u32 2147483647, %v240
    %v879 = vand.u32 %v878, 8388607
    %v880 = vor.u32 %v879, 8388608
    %v881 = vsub.s32 0, %v880
    %v882 = vadd.s32 %v877, 1
    %vm883 = vcmp.gt.s32.totalorder %v882, 0
    %v884 = vsel %vm883, %v882, 0
    %v885 = vshrl.u32 %v884, 5
    %v886 = vand.u32 %v884, 31
    %v887 = vsub.s32 32, %v886
    %v888 = vshrl.u32 683565275, %v887
    %v889 = vshll.u32 683565275, %v886
    %v890 = vshrl.u32 2475754826, %v887
    %v891 = vor.u32 %v889, %v890
    %v892 = vshll.u32 2475754826, %v886
    %v893 = vshrl.u32 2131351028, %v887
    %v894 = vor.u32 %v892, %v893
    %v895 = vshll.u32 2131351028, %v886
    %v896 = vshrl.u32 2102212464, %v887
    %v897 = vor.u32 %v895, %v896
    %v898 = vshll.u32 2102212464, %v886
    %v899 = vshrl.u32 920167782, %v887
    %v900 = vor.u32 %v898, %v899
    %v901 = vshll.u32 920167782, %v886
    %v902 = vshrl.u32 1326507024, %v887
    %v903 = vor.u32 %v901, %v902
    %vm904 = vcmp.lt.s32.totalorder %v885, 1
    %vm905 = vcmp.lt.s32.totalorder %v885, 2
    %vm906 = vcmp.lt.s32.totalorder %v885, 3
    %vm907 = vcmp.lt.s32.totalorder %v885, 4
    %v908 = vsel %vm904, %v888, %v891
    %v909 = vsel %vm907, %v897, 2102212464
    %v910 = vsel %vm906, %v894, %v909
    %v911 = vsel %vm905, %v908, %v910
    %v912 = vsel %vm904, %v891, %v894
    %v913 = vsel %vm907, %v900, 920167782
    %v914 = vsel %vm906, %v897, %v913
    %v915 = vsel %vm905, %v912, %v914
    %v916 = vsel %vm904, %v894, %v897
    %v917 = vsel %vm907, %v903, 1326507024
    %v918 = vsel %vm906, %v900, %v917
    %v919 = vsel %vm905, %v916, %v918
    %v920 = vshll.u32 %v880, 8
    %v921 = vand.u32 %v920, 65535
    %v922 = vshrl.u32 %v920, 16
    %v923 = vand.u32 %v919, 65535
    %v924 = vshrl.u32 %v919, 16
    %v925 = vmul.u32 %v921, %v923
    %v926 = vmul.u32 %v921, %v924
    %v927 = vmul.u32 %v922, %v923
    %v928 = vmul.u32 %v922, %v924
    %v929 = vshll.u32 %v926, 16
    %v930 = vshrl.u32 %v926, 16
    %v931 = vshll.u32 %v927, 16
    %v932 = vshrl.u32 %v927, 16
    %vm933 = vc.u32 %v925, %v929
    %v934 = vsel %vm933, 1, 0
    %v935 = vadd.s32 %v925, %v929
    %v936 = vadd.s32 %v928, %v934
    %vm937 = vc.u32 %v935, %v931
    %v938 = vsel %vm937, 1, 0
    %v939 = vadd.s32 %v935, %v931
    %v940 = vadd.s32 %v936, %v938
    %v941 = vadd.s32 %v940, %v930
    %v942 = vadd.s32 %v941, %v932
    %v943 = vand.u32 %v920, 65535
    %v944 = vshrl.u32 %v920, 16
    %v945 = vand.u32 %v915, 65535
    %v946 = vshrl.u32 %v915, 16
    %v947 = vmul.u32 %v943, %v945
    %v948 = vmul.u32 %v943, %v946
    %v949 = vmul.u32 %v944, %v945
    %v950 = vmul.u32 %v944, %v946
    %v951 = vshll.u32 %v948, 16
    %v952 = vshrl.u32 %v948, 16
    %v953 = vshll.u32 %v949, 16
    %v954 = vshrl.u32 %v949, 16
    %vm955 = vc.u32 %v947, %v951
    %v956 = vsel %vm955, 1, 0
    %v957 = vadd.s32 %v947, %v951
    %v958 = vadd.s32 %v950, %v956
    %vm959 = vc.u32 %v957, %v953
    %v960 = vsel %vm959, 1, 0
    %v961 = vadd.s32 %v957, %v953
    %v962 = vadd.s32 %v958, %v960
    %v963 = vadd.s32 %v962, %v952
    %v964 = vadd.s32 %v963, %v954
    %v965 = vmul.u32 %v920, %v911
    %v966 = vadd.s32 %v942, %v961
    %vm967 = vc.u32 %v942, %v961
    %v968 = vadd.s32 %v964, 1
    %v969 = vsel %vm967, %v968, %v964
    %v970 = vadd.s32 %v965, %v969
    %v971 = vadd.s32 %v970, 536870912
    %v972 = vshrl.u32 %v971, 30
    %v973 = vshll.u32 %v972, 30
    %v974 = vsub.s32 %v970, %v973
    %vm975 = vcmp.lt.s32.totalorder %v974, 0
    %v976 = vsub.s32 0, %v974
    %v977 = vsel %vm975, %v976, %v974
    %v978 = vclz %v977
    %v979 = vsub.s32 %v978, 2
    %vm980 = vcmp.gt.s32.totalorder 0, %v979
    %v981 = vsel %vm980, 0, %v979
    %v982 = vsub.s32 32, %v981
    %v983 = vshll.u32 %v974, %v981
    %v984 = vshrl.u32 %v966, %v982
    %v985 = vor.u32 %v983, %v984
    %v986 = vsub.s32 4294967266, %v981
    %v987 = vadd.s32 %v986, 127
    %v988 = vshll.u32 %v987, 23
    %v989 = vor.u32 4788187, %v988
    %v990 = vand.u32 2147483647, %v989
    %v992 = vcvt.s32.f32 %v985
    %v993 = vmul.f32 %v992, %v990
    %v994 = vxor.u32 %v993, 2147483648
    %v995 = vsel %vm874, %v994, %v993
    %v996 = vsub.s32 4, %v972
    %v997 = vsel %vm874, %v996, %v972
    %v998 = vsel %vm873, %v240, %v995
    %v999 = vsel %vm873, 0, %v997
    %v1000 = vmul.f32 %v998, %v998
    %v1001 = vmul.f32 %v1000, -0.001358992
    %v1002 = vadd.f32 %v1001, 0.041655596
    %v1003 = vmul.f32 %v1000, %v1002
    %v1004 = vadd.f32 %v1003, -0.4999988
    %v1005 = vmul.f32 %v1000, %v1004
    %v1006 = vadd.f32 1.0, %v1005
    %v1007 = vmul.f32 %v998, %v998
    %v1008 = vmul.f32 %v1007, -0.00019511016
    %v1009 = vadd.f32 %v1008, 0.008332121
    %v1010 = vmul.f32 %v1007, %v1009
    %v1011 = vadd.f32 %v1010, -0.16666654
    %v1012 = vmul.f32 %v1007, %v1011
    %v1013 = vadd.f32 %v1012, 1.0
    %v1014 = vmul.f32 %v1013, %v998
    %vm1015 = vweird.f32 %v240
    %v1016 = vadd.s32 %v999, 3
    %v1017 = vand.u32 %v1016, 3
    %vm1018 = vcmp.lt.s32.totalorder %v1017, 2
    %vm1019 = vcmp.eq.s32.totalorder %v1017, 0
    %v1020 = vxor.u32 %v1014, 2147483648
    %v1021 = vsel %vm1019, %v1006, %v1020
    %vm1022 = vcmp.eq.s32.totalorder %v1017, 2
    %v1023 = vxor.u32 %v1006, 2147483648
    %v1024 = vsel %vm1022, %v1023, %v1014
    %v1025 = vsel %vm1018, %v1021, %v1024
    %v1026 = vsel %vm1015, nan, %v1025
    %v1027 = vand.u32 2147483647, %v241
    %vm1028 = vcmp.le.f32.partialorder %v1027, 0.7853982
    %vm1029 = vcmp.lt.s32.totalorder %v241, 0
    %v1030 = vand.u32 %v241, 2139095040
    %v1031 = vshrl.u32 %v1030, 23
    %v1032 = vsub.s32 %v1031, 127
    %v1033 = vand.u32 2147483647, %v241
    %v1034 = vand.u32 %v1033, 8388607
    %v1035 = vor.u32 %v1034, 8388608
    %v1036 = vsub.s32 0, %v1035
    %v1037 = vadd.s32 %v1032, 1
    %vm1038 = vcmp.gt.s32.totalorder %v1037, 0
    %v1039 = vsel %vm1038, %v1037, 0
    %v1040 = vshrl.u32 %v1039, 5
    %v1041 = vand.u32 %v1039, 31
    %v1042 = vsub.s32 32, %v1041
    %v1043 = vshrl.u32 683565275, %v1042
    %v1044 = vshll.u32 683565275, %v1041
    %v1045 = vshrl.u32 2475754826, %v1042
    %v1046 = vor.u32 %v1044, %v1045
    %v1047 = vshll.u32 2475754826, %v1041
    %v1048 = vshrl.u32 2131351028, %v1042
    %v1049 = vor.u32 %v1047, %v1048
    %v1050 = vshll.u32 2131351028, %v1041
    %v1051 = vshrl.u32 2102212464, %v1042
    %v1052 = vor.u32 %v1050, %v1051
    %v1053 = vshll.u32 2102212464, %v1041
    %v1054 = vshrl.u32 920167782, %v1042
    %v1055 = vor.u32 %v1053, %v1054
    %v1056 = vshll.u32 920167782, %v1041
    %v1057 = vshrl.u32 1326507024, %v1042
    %v1058 = vor.u32 %v1056, %v1057
    %vm1059 = vcmp.lt.s32.totalorder %v1040, 1
    %vm1060 = vcmp.lt.s32.totalorder %v1040, 2
    %vm1061 = vcmp.lt.s32.totalorder %v1040, 3
    %vm1062 = vcmp.lt.s32.totalorder %v1040, 4
    %v1063 = vsel %vm1059, %v1043, %v1046
    %v1064 = vsel %vm1062, %v1052, 2102212464
    %v1065 = vsel %vm1061, %v1049, %v1064
    %v1066 = vsel %vm1060, %v1063, %v1065
    %v1067 = vsel %vm1059, %v1046, %v1049
    %v1068 = vsel %vm1062, %v1055, 920167782
    %v1069 = vsel %vm1061, %v1052, %v1068
    %v1070 = vsel %vm1060, %v1067, %v1069
    %v1071 = vsel %vm1059, %v1049, %v1052
    %v1072 = vsel %vm1062, %v1058, 1326507024
    %v1073 = vsel %vm1061, %v1055, %v1072
    %v1074 = vsel %vm1060, %v1071, %v1073
    %v1075 = vshll.u32 %v1035, 8
    %v1076 = vand.u32 %v1075, 65535
    %v1077 = vshrl.u32 %v1075, 16
    %v1078 = vand.u32 %v1074, 65535
    %v1079 = vshrl.u32 %v1074, 16
    %v1080 = vmul.u32 %v1076, %v1078
    %v1081 = vmul.u32 %v1076, %v1079
    %v1082 = vmul.u32 %v1077, %v1078
    %v1083 = vmul.u32 %v1077, %v1079
    %v1084 = vshll.u32 %v1081, 16
    %v1085 = vshrl.u32 %v1081, 16
    %v1086 = vshll.u32 %v1082, 16
    %v1087 = vshrl.u32 %v1082, 16
    %vm1088 = vc.u32 %v1080, %v1084
    %v1089 = vsel %vm1088, 1, 0
    %v1090 = vadd.s32 %v1080, %v1084
    %v1091 = vadd.s32 %v1083, %v1089
    %vm1092 = vc.u32 %v1090, %v1086
    %v1093 = vsel %vm1092, 1, 0
    %v1094 = vadd.s32 %v1090, %v1086
    %v1095 = vadd.s32 %v1091, %v1093
    %v1096 = vadd.s32 %v1095, %v1085
    %v1097 = vadd.s32 %v1096, %v1087
    %v1098 = vand.u32 %v1075, 65535
    %v1099 = vshrl.u32 %v1075, 16
    %v1100 = vand.u32 %v1070, 65535
    %v1101 = vshrl.u32 %v1070, 16
    %v1102 = vmul.u32 %v1098, %v1100
    %v1103 = vmul.u32 %v1098, %v1101
    %v1104 = vmul.u32 %v1099, %v1100
    %v1105 = vmul.u32 %v1099, %v1101
    %v1106 = vshll.u32 %v1103, 16
    %v1107 = vshrl.u32 %v1103, 16
    %v1108 = vshll.u32 %v1104, 16
    %v1109 = vshrl.u32 %v1104, 16
    %vm1110 = vc.u32 %v1102, %v1106
    %v1111 = vsel %vm1110, 1, 0
    %v1112 = vadd.s32 %v1102, %v1106
    %v1113 = vadd.s32 %v1105, %v1111
    %vm1114 = vc.u32 %v1112, %v1108
    %v1115 = vsel %vm1114, 1, 0
    %v1116 = vadd.s32 %v1112, %v1108
    %v1117 = vadd.s32 %v1113, %v1115
    %v1118 = vadd.s32 %v1117, %v1107
    %v1119 = vadd.s32 %v1118, %v1109
    %v1120 = vmul.u32 %v1075, %v1066
    %v1121 = vadd.s32 %v1097, %v1116
    %vm1122 = vc.u32 %v1097, %v1116
    %v1123 = vadd.s32 %v1119, 1
    %v1124 = vsel %vm1122, %v1123, %v1119
    %v1125 = vadd.s32 %v1120, %v1124
    %v1126 = vadd.s32 %v1125, 536870912
    %v1127 = vshrl.u32 %v1126, 30
    %v1128 = vshll.u32 %v1127, 30
    %v1129 = vsub.s32 %v1125, %v1128
    %vm1130 = vcmp.lt.s32.totalorder %v1129, 0
    %v1131 = vsub.s32 0, %v1129
    %v1132 = vsel %vm1130, %v1131, %v1129
    %v1133 = vclz %v1132
    %v1134 = vsub.s32 %v1133, 2
    %vm1135 = vcmp.gt.s32.totalorder 0, %v1134
    %v1136 = vsel %vm1135, 0, %v1134
    %v1137 = vsub.s32 32, %v1136
    %v1138 = vshll.u32 %v1129, %v1136
    %v1139 = vshrl.u32 %v1121, %v1137
    %v1140 = vor.u32 %v1138, %v1139
    %v1141 = vsub.s32 4294967266, %v1136
    %v1142 = vadd.s32 %v1141, 127
    %v1143 = vshll.u32 %v1142, 23
    %v1144 = vor.u32 4788187, %v1143
    %v1145 = vand.u32 2147483647, %v1144
    %v1147 = vcvt.s32.f32 %v1140
    %v1148 = vmul.f32 %v1147, %v1145
    %v1149 = vxor.u32 %v1148, 2147483648
    %v1150 = vsel %vm1029, %v1149, %v1148
    %v1151 = vsub.s32 4, %v1127
    %v1152 = vsel %vm1029, %v1151, %v1127
    %v1153 = vsel %vm1028, %v241, %v1150
    %v1154 = vsel %vm1028, 0, %v1152
    %v1155 = vmul.f32 %v1153, %v1153
    %v1156 = vmul.f32 %v1155, -0.001358992
    %v1157 = vadd.f32 %v1156, 0.041655596
    %v1158 = vmul.f32 %v1155, %v1157
    %v1159 = vadd.f32 %v1158, -0.4999988
    %v1160 = vmul.f32 %v1155, %v1159
    %v1161 = vadd.f32 1.0, %v1160
    %v1162 = vmul.f32 %v1153, %v1153
    %v1163 = vmul.f32 %v1162, -0.00019511016
    %v1164 = vadd.f32 %v1163, 0.008332121
    %v1165 = vmul.f32 %v1162, %v1164
    %v1166 = vadd.f32 %v1165, -0.16666654
    %v1167 = vmul.f32 %v1162, %v1166
    %v1168 = vadd.f32 %v1167, 1.0
    %v1169 = vmul.f32 %v1168, %v1153
    %vm1170 = vweird.f32 %v241
    %v1171 = vadd.s32 %v1154, 3
    %v1172 = vand.u32 %v1171, 3
    %vm1173 = vcmp.lt.s32.totalorder %v1172, 2
    %vm1174 = vcmp.eq.s32.totalorder %v1172, 0
    %v1175 = vxor.u32 %v1169, 2147483648
    %v1176 = vsel %vm1174, %v1161, %v1175
    %vm1177 = vcmp.eq.s32.totalorder %v1172, 2
    %v1178 = vxor.u32 %v1161, 2147483648
    %v1179 = vsel %vm1177, %v1178, %v1169
    %v1180 = vsel %vm1173, %v1176, %v1179
    %v1181 = vsel %vm1170, nan, %v1180
    %v1182 = vand.u32 2147483647, %v242
    %vm1183 = vcmp.le.f32.partialorder %v1182, 0.7853982
    %vm1184 = vcmp.lt.s32.totalorder %v242, 0
    %v1185 = vand.u32 %v242, 2139095040
    %v1186 = vshrl.u32 %v1185, 23
    %v1187 = vsub.s32 %v1186, 127
    %v1188 = vand.u32 2147483647, %v242
    %v1189 = vand.u32 %v1188, 8388607
    %v1190 = vor.u32 %v1189, 8388608
    %v1191 = vsub.s32 0, %v1190
    %v1192 = vadd.s32 %v1187, 1
    %vm1193 = vcmp.gt.s32.totalorder %v1192, 0
    %v1194 = vsel %vm1193, %v1192, 0
    %v1195 = vshrl.u32 %v1194, 5
    %v1196 = vand.u32 %v1194, 31
    %v1197 = vsub.s32 32, %v1196
    %v1198 = vshrl.u32 683565275, %v1197
    %v1199 = vshll.u32 683565275, %v1196
    %v1200 = vshrl.u32 2475754826, %v1197
    %v1201 = vor.u32 %v1199, %v1200
    %v1202 = vshll.u32 2475754826, %v1196
    %v1203 = vshrl.u32 2131351028, %v1197
    %v1204 = vor.u32 %v1202, %v1203
    %v1205 = vshll.u32 2131351028, %v1196
    %v1206 = vshrl.u32 2102212464, %v1197
    %v1207 = vor.u32 %v1205, %v1206
    %v1208 = vshll.u32 2102212464, %v1196
    %v1209 = vshrl.u32 920167782, %v1197
    %v1210 = vor.u32 %v1208, %v1209
    %v1211 = vshll.u32 920167782, %v1196
    %v1212 = vshrl.u32 1326507024, %v1197
    %v1213 = vor.u32 %v1211, %v1212
    %vm1214 = vcmp.lt.s32.totalorder %v1195, 1
    %vm1215 = vcmp.lt.s32.totalorder %v1195, 2
    %vm1216 = vcmp.lt.s32.totalorder %v1195, 3
    %vm1217 = vcmp.lt.s32.totalorder %v1195, 4
    %v1218 = vsel %vm1214, %v1198, %v1201
    %v1219 = vsel %vm1217, %v1207, 2102212464
    %v1220 = vsel %vm1216, %v1204, %v1219
    %v1221 = vsel %vm1215, %v1218, %v1220
    %v1222 = vsel %vm1214, %v1201, %v1204
    %v1223 = vsel %vm1217, %v1210, 920167782
    %v1224 = vsel %vm1216, %v1207, %v1223
    %v1225 = vsel %vm1215, %v1222, %v1224
    %v1226 = vsel %vm1214, %v1204, %v1207
    %v1227 = vsel %vm1217, %v1213, 1326507024
    %v1228 = vsel %vm1216, %v1210, %v1227
    %v1229 = vsel %vm1215, %v1226, %v1228
    %v1230 = vshll.u32 %v1190, 8
    %v1231 = vand.u32 %v1230, 65535
    %v1232 = vshrl.u32 %v1230, 16
    %v1233 = vand.u32 %v1229, 65535
    %v1234 = vshrl.u32 %v1229, 16
    %v1235 = vmul.u32 %v1231, %v1233
    %v1236 = vmul.u32 %v1231, %v1234
    %v1237 = vmul.u32 %v1232, %v1233
    %v1238 = vmul.u32 %v1232, %v1234
    %v1239 = vshll.u32 %v1236, 16
    %v1240 = vshrl.u32 %v1236, 16
    %v1241 = vshll.u32 %v1237, 16
    %v1242 = vshrl.u32 %v1237, 16
    %vm1243 = vc.u32 %v1235, %v1239
    %v1244 = vsel %vm1243, 1, 0
    %v1245 = vadd.s32 %v1235, %v1239
    %v1246 = vadd.s32 %v1238, %v1244
    %vm1247 = vc.u32 %v1245, %v1241
    %v1248 = vsel %vm1247, 1, 0
    %v1249 = vadd.s32 %v1245, %v1241
    %v1250 = vadd.s32 %v1246, %v1248
    %v1251 = vadd.s32 %v1250, %v1240
    %v1252 = vadd.s32 %v1251, %v1242
    %v1253 = vand.u32 %v1230, 65535
    %v1254 = vshrl.u32 %v1230, 16
    %v1255 = vand.u32 %v1225, 65535
    %v1256 = vshrl.u32 %v1225, 16
    %v1257 = vmul.u32 %v1253, %v1255
    %v1258 = vmul.u32 %v1253, %v1256
    %v1259 = vmul.u32 %v1254, %v1255
    %v1260 = vmul.u32 %v1254, %v1256
    %v1261 = vshll.u32 %v1258, 16
    %v1262 = vshrl.u32 %v1258, 16
    %v1263 = vshll.u32 %v1259, 16
    %v1264 = vshrl.u32 %v1259, 16
    %vm1265 = vc.u32 %v1257, %v1261
    %v1266 = vsel %vm1265, 1, 0
    %v1267 = vadd.s32 %v1257, %v1261
    %v1268 = vadd.s32 %v1260, %v1266
    %vm1269 = vc.u32 %v1267, %v1263
    %v1270 = vsel %vm1269, 1, 0
    %v1271 = vadd.s32 %v1267, %v1263
    %v1272 = vadd.s32 %v1268, %v1270
    %v1273 = vadd.s32 %v1272, %v1262
    %v1274 = vadd.s32 %v1273, %v1264
    %v1275 = vmul.u32 %v1230, %v1221
    %v1276 = vadd.s32 %v1252, %v1271
    %vm1277 = vc.u32 %v1252, %v1271
    %v1278 = vadd.s32 %v1274, 1
    %v1279 = vsel %vm1277, %v1278, %v1274
    %v1280 = vadd.s32 %v1275, %v1279
    %v1281 = vadd.s32 %v1280, 536870912
    %v1282 = vshrl.u32 %v1281, 30
    %v1283 = vshll.u32 %v1282, 30
    %v1284 = vsub.s32 %v1280, %v1283
    %vm1285 = vcmp.lt.s32.totalorder %v1284, 0
    %v1286 = vsub.s32 0, %v1284
    %v1287 = vsel %vm1285, %v1286, %v1284
    %v1288 = vclz %v1287
    %v1289 = vsub.s32 %v1288, 2
    %vm1290 = vcmp.gt.s32.totalorder 0, %v1289
    %v1291 = vsel %vm1290, 0, %v1289
    %v1292 = vsub.s32 32, %v1291
    %v1293 = vshll.u32 %v1284, %v1291
    %v1294 = vshrl.u32 %v1276, %v1292
    %v1295 = vor.u32 %v1293, %v1294
    %v1296 = vsub.s32 4294967266, %v1291
    %v1297 = vadd.s32 %v1296, 127
    %v1298 = vshll.u32 %v1297, 23
    %v1299 = vor.u32 4788187, %v1298
    %v1300 = vand.u32 2147483647, %v1299
    %v1302 = vcvt.s32.f32 %v1295
    %v1303 = vmul.f32 %v1302, %v1300
    %v1304 = vxor.u32 %v1303, 2147483648
    %v1305 = vsel %vm1184, %v1304, %v1303
    %v1306 = vsub.s32 4, %v1282
    %v1307 = vsel %vm1184, %v1306, %v1282
    %v1308 = vsel %vm1183, %v242, %v1305
    %v1309 = vsel %vm1183, 0, %v1307
    %v1310 = vmul.f32 %v1308, %v1308
    %v1311 = vmul.f32 %v1310, -0.001358992
    %v1312 = vadd.f32 %v1311, 0.041655596
    %v1313 = vmul.f32 %v1310, %v1312
    %v1314 = vadd.f32 %v1313, -0.4999988
    %v1315 = vmul.f32 %v1310, %v1314
    %v1316 = vadd.f32 1.0, %v1315
    %v1317 = vmul.f32 %v1308, %v1308
    %v1318 = vmul.f32 %v1317, -0.00019511016
    %v1319 = vadd.f32 %v1318, 0.008332121
    %v1320 = vmul.f32 %v1317, %v1319
    %v1321 = vadd.f32 %v1320, -0.16666654
    %v1322 = vmul.f32 %v1317, %v1321
    %v1323 = vadd.f32 %v1322, 1.0
    %v1324 = vmul.f32 %v1323, %v1308
    %vm1325 = vweird.f32 %v242
    %v1326 = vadd.s32 %v1309, 3
    %v1327 = vand.u32 %v1326, 3
    %vm1328 = vcmp.lt.s32.totalorder %v1327, 2
    %vm1329 = vcmp.eq.s32.totalorder %v1327, 0
    %v1330 = vxor.u32 %v1324, 2147483648
    %v1331 = vsel %vm1329, %v1316, %v1330
    %vm1332 = vcmp.eq.s32.totalorder %v1327, 2
    %v1333 = vxor.u32 %v1316, 2147483648
    %v1334 = vsel %vm1332, %v1333, %v1324
    %v1335 = vsel %vm1328, %v1331, %v1334
    %v1336 = vsel %vm1325, nan, %v1335
    %v1337 = vand.u32 2147483647, %v243
    %vm1338 = vcmp.le.f32.partialorder %v1337, 0.7853982
    %vm1339 = vcmp.lt.s32.totalorder %v243, 0
    %v1340 = vand.u32 %v243, 2139095040
    %v1341 = vshrl.u32 %v1340, 23
    %v1342 = vsub.s32 %v1341, 127
    %v1343 = vand.u32 2147483647, %v243
    %v1344 = vand.u32 %v1343, 8388607
    %v1345 = vor.u32 %v1344, 8388608
    %v1346 = vsub.s32 0, %v1345
    %v1347 = vadd.s32 %v1342, 1
    %vm1348 = vcmp.gt.s32.totalorder %v1347, 0
    %v1349 = vsel %vm1348, %v1347, 0
    %v1350 = vshrl.u32 %v1349, 5
    %v1351 = vand.u32 %v1349, 31
    %v1352 = vsub.s32 32, %v1351
    %v1353 = vshrl.u32 683565275, %v1352
    %v1354 = vshll.u32 683565275, %v1351
    %v1355 = vshrl.u32 2475754826, %v1352
    %v1356 = vor.u32 %v1354, %v1355
    %v1357 = vshll.u32 2475754826, %v1351
    %v1358 = vshrl.u32 2131351028, %v1352
    %v1359 = vor.u32 %v1357, %v1358
    %v1360 = vshll.u32 2131351028, %v1351
    %v1361 = vshrl.u32 2102212464, %v1352
    %v1362 = vor.u32 %v1360, %v1361
    %v1363 = vshll.u32 2102212464, %v1351
    %v1364 = vshrl.u32 920167782, %v1352
    %v1365 = vor.u32 %v1363, %v1364
    %v1366 = vshll.u32 920167782, %v1351
    %v1367 = vshrl.u32 1326507024, %v1352
    %v1368 = vor.u32 %v1366, %v1367
    %vm1369 = vcmp.lt.s32.totalorder %v1350, 1
    %vm1370 = vcmp.lt.s32.totalorder %v1350, 2
    %vm1371 = vcmp.lt.s32.totalorder %v1350, 3
    %vm1372 = vcmp.lt.s32.totalorder %v1350, 4
    %v1373 = vsel %vm1369, %v1353, %v1356
    %v1374 = vsel %vm1372, %v1362, 2102212464
    %v1375 = vsel %vm1371, %v1359, %v1374
    %v1376 = vsel %vm1370, %v1373, %v1375
    %v1377 = vsel %vm1369, %v1356, %v1359
    %v1378 = vsel %vm1372, %v1365, 920167782
    %v1379 = vsel %vm1371, %v1362, %v1378
    %v1380 = vsel %vm1370, %v1377, %v1379
    %v1381 = vsel %vm1369, %v1359, %v1362
    %v1382 = vsel %vm1372, %v1368, 1326507024
    %v1383 = vsel %vm1371, %v1365, %v1382
    %v1384 = vsel %vm1370, %v1381, %v1383
    %v1385 = vshll.u32 %v1345, 8
    %v1386 = vand.u32 %v1385, 65535
    %v1387 = vshrl.u32 %v1385, 16
    %v1388 = vand.u32 %v1384, 65535
    %v1389 = vshrl.u32 %v1384, 16
    %v1390 = vmul.u32 %v1386, %v1388
    %v1391 = vmul.u32 %v1386, %v1389
    %v1392 = vmul.u32 %v1387, %v1388
    %v1393 = vmul.u32 %v1387, %v1389
    %v1394 = vshll.u32 %v1391, 16
    %v1395 = vshrl.u32 %v1391, 16
    %v1396 = vshll.u32 %v1392, 16
    %v1397 = vshrl.u32 %v1392, 16
    %vm1398 = vc.u32 %v1390, %v1394
    %v1399 = vsel %vm1398, 1, 0
    %v1400 = vadd.s32 %v1390, %v1394
    %v1401 = vadd.s32 %v1393, %v1399
    %vm1402 = vc.u32 %v1400, %v1396
    %v1403 = vsel %vm1402, 1, 0
    %v1404 = vadd.s32 %v1400, %v1396
    %v1405 = vadd.s32 %v1401, %v1403
    %v1406 = vadd.s32 %v1405, %v1395
    %v1407 = vadd.s32 %v1406, %v1397
    %v1408 = vand.u32 %v1385, 65535
    %v1409 = vshrl.u32 %v1385, 16
    %v1410 = vand.u32 %v1380, 65535
    %v1411 = vshrl.u32 %v1380, 16
    %v1412 = vmul.u32 %v1408, %v1410
    %v1413 = vmul.u32 %v1408, %v1411
    %v1414 = vmul.u32 %v1409, %v1410
    %v1415 = vmul.u32 %v1409, %v1411
    %v1416 = vshll.u32 %v1413, 16
    %v1417 = vshrl.u32 %v1413, 16
    %v1418 = vshll.u32 %v1414, 16
    %v1419 = vshrl.u32 %v1414, 16
    %vm1420 = vc.u32 %v1412, %v1416
    %v1421 = vsel %vm1420, 1, 0
    %v1422 = vadd.s32 %v1412, %v1416
    %v1423 = vadd.s32 %v1415, %v1421
    %vm1424 = vc.u32 %v1422, %v1418
    %v1425 = vsel %vm1424, 1, 0
    %v1426 = vadd.s32 %v1422, %v1418
    %v1427 = vadd.s32 %v1423, %v1425
    %v1428 = vadd.s32 %v1427, %v1417
    %v1429 = vadd.s32 %v1428, %v1419
    %v1430 = vmul.u32 %v1385, %v1376
    %v1431 = vadd.s32 %v1407, %v1426
    %vm1432 = vc.u32 %v1407, %v1426
    %v1433 = vadd.s32 %v1429, 1
    %v1434 = vsel %vm1432, %v1433, %v1429
    %v1435 = vadd.s32 %v1430, %v1434
    %v1436 = vadd.s32 %v1435, 536870912
    %v1437 = vshrl.u32 %v1436, 30
    %v1438 = vshll.u32 %v1437, 30
    %v1439 = vsub.s32 %v1435, %v1438
    %vm1440 = vcmp.lt.s32.totalorder %v1439, 0
    %v1441 = vsub.s32 0, %v1439
    %v1442 = vsel %vm1440, %v1441, %v1439
    %v1443 = vclz %v1442
    %v1444 = vsub.s32 %v1443, 2
    %vm1445 = vcmp.gt.s32.totalorder 0, %v1444
    %v1446 = vsel %vm1445, 0, %v1444
    %v1447 = vsub.s32 32, %v1446
    %v1448 = vshll.u32 %v1439, %v1446
    %v1449 = vshrl.u32 %v1431, %v1447
    %v1450 = vor.u32 %v1448, %v1449
    %v1451 = vsub.s32 4294967266, %v1446
    %v1452 = vadd.s32 %v1451, 127
    %v1453 = vshll.u32 %v1452, 23
    %v1454 = vor.u32 4788187, %v1453
    %v1455 = vand.u32 2147483647, %v1454
    %v1457 = vcvt.s32.f32 %v1450
    %v1458 = vmul.f32 %v1457, %v1455
    %v1459 = vxor.u32 %v1458, 2147483648
    %v1460 = vsel %vm1339, %v1459, %v1458
    %v1461 = vsub.s32 4, %v1437
    %v1462 = vsel %vm1339, %v1461, %v1437
    %v1463 = vsel %vm1338, %v243, %v1460
    %v1464 = vsel %vm1338, 0, %v1462
    %v1465 = vmul.f32 %v1463, %v1463
    %v1466 = vmul.f32 %v1465, -0.001358992
    %v1467 = vadd.f32 %v1466, 0.041655596
    %v1468 = vmul.f32 %v1465, %v1467
    %v1469 = vadd.f32 %v1468, -0.4999988
    %v1470 = vmul.f32 %v1465, %v1469
    %v1471 = vadd.f32 1.0, %v1470
    %v1472 = vmul.f32 %v1463, %v1463
    %v1473 = vmul.f32 %v1472, -0.00019511016
    %v1474 = vadd.f32 %v1473, 0.008332121
    %v1475 = vmul.f32 %v1472, %v1474
    %v1476 = vadd.f32 %v1475, -0.16666654
    %v1477 = vmul.f32 %v1472, %v1476
    %v1478 = vadd.f32 %v1477, 1.0
    %v1479 = vmul.f32 %v1478, %v1463
    %vm1480 = vweird.f32 %v243
    %v1481 = vadd.s32 %v1464, 3
    %v1482 = vand.u32 %v1481, 3
    %vm1483 = vcmp.lt.s32.totalorder %v1482, 2
    %vm1484 = vcmp.eq.s32.totalorder %v1482, 0
    %v1485 = vxor.u32 %v1479, 2147483648
    %v1486 = vsel %vm1484, %v1471, %v1485
    %vm1487 = vcmp.eq.s32.totalorder %v1482, 2
    %v1488 = vxor.u32 %v1471, 2147483648
    %v1489 = vsel %vm1487, %v1488, %v1479
    %v1490 = vsel %vm1483, %v1486, %v1489
    %v1491 = vsel %vm1480, nan, %v1490
    %v1492 = vand.u32 2147483647, %v244
    %vm1493 = vcmp.le.f32.partialorder %v1492, 0.7853982
    %vm1494 = vcmp.lt.s32.totalorder %v244, 0
    %v1495 = vand.u32 %v244, 2139095040
    %v1496 = vshrl.u32 %v1495, 23
    %v1497 = vsub.s32 %v1496, 127
    %v1498 = vand.u32 2147483647, %v244
    %v1499 = vand.u32 %v1498, 8388607
    %v1500 = vor.u32 %v1499, 8388608
    %v1501 = vsub.s32 0, %v1500
    %v1502 = vadd.s32 %v1497, 1
    %vm1503 = vcmp.gt.s32.totalorder %v1502, 0
    %v1504 = vsel %vm1503, %v1502, 0
    %v1505 = vshrl.u32 %v1504, 5
    %v1506 = vand.u32 %v1504, 31
    %v1507 = vsub.s32 32, %v1506
    %v1508 = vshrl.u32 683565275, %v1507
    %v1509 = vshll.u32 683565275, %v1506
    %v1510 = vshrl.u32 2475754826, %v1507
    %v1511 = vor.u32 %v1509, %v1510
    %v1512 = vshll.u32 2475754826, %v1506
    %v1513 = vshrl.u32 2131351028, %v1507
    %v1514 = vor.u32 %v1512, %v1513
    %v1515 = vshll.u32 2131351028, %v1506
    %v1516 = vshrl.u32 2102212464, %v1507
    %v1517 = vor.u32 %v1515, %v1516
    %v1518 = vshll.u32 2102212464, %v1506
    %v1519 = vshrl.u32 920167782, %v1507
    %v1520 = vor.u32 %v1518, %v1519
    %v1521 = vshll.u32 920167782, %v1506
    %v1522 = vshrl.u32 1326507024, %v1507
    %v1523 = vor.u32 %v1521, %v1522
    %vm1524 = vcmp.lt.s32.totalorder %v1505, 1
    %vm1525 = vcmp.lt.s32.totalorder %v1505, 2
    %vm1526 = vcmp.lt.s32.totalorder %v1505, 3
    %vm1527 = vcmp.lt.s32.totalorder %v1505, 4
    %v1528 = vsel %vm1524, %v1508, %v1511
    %v1529 = vsel %vm1527, %v1517, 2102212464
    %v1530 = vsel %vm1526, %v1514, %v1529
    %v1531 = vsel %vm1525, %v1528, %v1530
    %v1532 = vsel %vm1524, %v1511, %v1514
    %v1533 = vsel %vm1527, %v1520, 920167782
    %v1534 = vsel %vm1526, %v1517, %v1533
    %v1535 = vsel %vm1525, %v1532, %v1534
    %v1536 = vsel %vm1524, %v1514, %v1517
    %v1537 = vsel %vm1527, %v1523, 1326507024
    %v1538 = vsel %vm1526, %v1520, %v1537
    %v1539 = vsel %vm1525, %v1536, %v1538
    %v1540 = vshll.u32 %v1500, 8
    %v1541 = vand.u32 %v1540, 65535
    %v1542 = vshrl.u32 %v1540, 16
    %v1543 = vand.u32 %v1539, 65535
    %v1544 = vshrl.u32 %v1539, 16
    %v1545 = vmul.u32 %v1541, %v1543
    %v1546 = vmul.u32 %v1541, %v1544
    %v1547 = vmul.u32 %v1542, %v1543
    %v1548 = vmul.u32 %v1542, %v1544
    %v1549 = vshll.u32 %v1546, 16
    %v1550 = vshrl.u32 %v1546, 16
    %v1551 = vshll.u32 %v1547, 16
    %v1552 = vshrl.u32 %v1547, 16
    %vm1553 = vc.u32 %v1545, %v1549
    %v1554 = vsel %vm1553, 1, 0
    %v1555 = vadd.s32 %v1545, %v1549
    %v1556 = vadd.s32 %v1548, %v1554
    %vm1557 = vc.u32 %v1555, %v1551
    %v1558 = vsel %vm1557, 1, 0
    %v1559 = vadd.s32 %v1555, %v1551
    %v1560 = vadd.s32 %v1556, %v1558
    %v1561 = vadd.s32 %v1560, %v1550
    %v1562 = vadd.s32 %v1561, %v1552
    %v1563 = vand.u32 %v1540, 65535
    %v1564 = vshrl.u32 %v1540, 16
    %v1565 = vand.u32 %v1535, 65535
    %v1566 = vshrl.u32 %v1535, 16
    %v1567 = vmul.u32 %v1563, %v1565
    %v1568 = vmul.u32 %v1563, %v1566
    %v1569 = vmul.u32 %v1564, %v1565
    %v1570 = vmul.u32 %v1564, %v1566
    %v1571 = vshll.u32 %v1568, 16
    %v1572 = vshrl.u32 %v1568, 16
    %v1573 = vshll.u32 %v1569, 16
    %v1574 = vshrl.u32 %v1569, 16
    %vm1575 = vc.u32 %v1567, %v1571
    %v1576 = vsel %vm1575, 1, 0
    %v1577 = vadd.s32 %v1567, %v1571
    %v1578 = vadd.s32 %v1570, %v1576
    %vm1579 = vc.u32 %v1577, %v1573
    %v1580 = vsel %vm1579, 1, 0
    %v1581 = vadd.s32 %v1577, %v1573
    %v1582 = vadd.s32 %v1578, %v1580
    %v1583 = vadd.s32 %v1582, %v1572
    %v1584 = vadd.s32 %v1583, %v1574
    %v1585 = vmul.u32 %v1540, %v1531
    %v1586 = vadd.s32 %v1562, %v1581
    %vm1587 = vc.u32 %v1562, %v1581
    %v1588 = vadd.s32 %v1584, 1
    %v1589 = vsel %vm1587, %v1588, %v1584
    %v1590 = vadd.s32 %v1585, %v1589
    %v1591 = vadd.s32 %v1590, 536870912
    %v1592 = vshrl.u32 %v1591, 30
    %v1593 = vshll.u32 %v1592, 30
    %v1594 = vsub.s32 %v1590, %v1593
    %vm1595 = vcmp.lt.s32.totalorder %v1594, 0
    %v1596 = vsub.s32 0, %v1594
    %v1597 = vsel %vm1595, %v1596, %v1594
    %v1598 = vclz %v1597
    %v1599 = vsub.s32 %v1598, 2
    %vm1600 = vcmp.gt.s32.totalorder 0, %v1599
    %v1601 = vsel %vm1600, 0, %v1599
    %v1602 = vsub.s32 32, %v1601
    %v1603 = vshll.u32 %v1594, %v1601
    %v1604 = vshrl.u32 %v1586, %v1602
    %v1605 = vor.u32 %v1603, %v1604
    %v1606 = vsub.s32 4294967266, %v1601
    %v1607 = vadd.s32 %v1606, 127
    %v1608 = vshll.u32 %v1607, 23
    %v1609 = vor.u32 4788187, %v1608
    %v1610 = vand.u32 2147483647, %v1609
    %v1612 = vcvt.s32.f32 %v1605
    %v1613 = vmul.f32 %v1612, %v1610
    %v1614 = vxor.u32 %v1613, 2147483648
    %v1615 = vsel %vm1494, %v1614, %v1613
    %v1616 = vsub.s32 4, %v1592
    %v1617 = vsel %vm1494, %v1616, %v1592
    %v1618 = vsel %vm1493, %v244, %v1615
    %v1619 = vsel %vm1493, 0, %v1617
    %v1620 = vmul.f32 %v1618, %v1618
    %v1621 = vmul.f32 %v1620, -0.001358992
    %v1622 = vadd.f32 %v1621, 0.041655596
    %v1623 = vmul.f32 %v1620, %v1622
    %v1624 = vadd.f32 %v1623, -0.4999988
    %v1625 = vmul.f32 %v1620, %v1624
    %v1626 = vadd.f32 1.0, %v1625
    %v1627 = vmul.f32 %v1618, %v1618
    %v1628 = vmul.f32 %v1627, -0.00019511016
    %v1629 = vadd.f32 %v1628, 0.008332121
    %v1630 = vmul.f32 %v1627, %v1629
    %v1631 = vadd.f32 %v1630, -0.16666654
    %v1632 = vmul.f32 %v1627, %v1631
    %v1633 = vadd.f32 %v1632, 1.0
    %v1634 = vmul.f32 %v1633, %v1618
    %vm1635 = vweird.f32 %v244
    %v1636 = vadd.s32 %v1619, 3
    %v1637 = vand.u32 %v1636, 3
    %vm1638 = vcmp.lt.s32.totalorder %v1637, 2
    %vm1639 = vcmp.eq.s32.totalorder %v1637, 0
    %v1640 = vxor.u32 %v1634, 2147483648
    %v1641 = vsel %vm1639, %v1626, %v1640
    %vm1642 = vcmp.eq.s32.totalorder %v1637, 2
    %v1643 = vxor.u32 %v1626, 2147483648
    %v1644 = vsel %vm1642, %v1643, %v1634
    %v1645 = vsel %vm1638, %v1641, %v1644
    %v1646 = vsel %vm1635, nan, %v1645
    %v1647 = vand.u32 2147483647, %v245
    %vm1648 = vcmp.le.f32.partialorder %v1647, 0.7853982
    %vm1649 = vcmp.lt.s32.totalorder %v245, 0
    %v1650 = vand.u32 %v245, 2139095040
    %v1651 = vshrl.u32 %v1650, 23
    %v1652 = vsub.s32 %v1651, 127
    %v1653 = vand.u32 2147483647, %v245
    %v1654 = vand.u32 %v1653, 8388607
    %v1655 = vor.u32 %v1654, 8388608
    %v1656 = vsub.s32 0, %v1655
    %v1657 = vadd.s32 %v1652, 1
    %vm1658 = vcmp.gt.s32.totalorder %v1657, 0
    %v1659 = vsel %vm1658, %v1657, 0
    %v1660 = vshrl.u32 %v1659, 5
    %v1661 = vand.u32 %v1659, 31
    %v1662 = vsub.s32 32, %v1661
    %v1663 = vshrl.u32 683565275, %v1662
    %v1664 = vshll.u32 683565275, %v1661
    %v1665 = vshrl.u32 2475754826, %v1662
    %v1666 = vor.u32 %v1664, %v1665
    %v1667 = vshll.u32 2475754826, %v1661
    %v1668 = vshrl.u32 2131351028, %v1662
    %v1669 = vor.u32 %v1667, %v1668
    %v1670 = vshll.u32 2131351028, %v1661
    %v1671 = vshrl.u32 2102212464, %v1662
    %v1672 = vor.u32 %v1670, %v1671
    %v1673 = vshll.u32 2102212464, %v1661
    %v1674 = vshrl.u32 920167782, %v1662
    %v1675 = vor.u32 %v1673, %v1674
    %v1676 = vshll.u32 920167782, %v1661
    %v1677 = vshrl.u32 1326507024, %v1662
    %v1678 = vor.u32 %v1676, %v1677
    %vm1679 = vcmp.lt.s32.totalorder %v1660, 1
    %vm1680 = vcmp.lt.s32.totalorder %v1660, 2
    %vm1681 = vcmp.lt.s32.totalorder %v1660, 3
    %vm1682 = vcmp.lt.s32.totalorder %v1660, 4
    %v1683 = vsel %vm1679, %v1663, %v1666
    %v1684 = vsel %vm1682, %v1672, 2102212464
    %v1685 = vsel %vm1681, %v1669, %v1684
    %v1686 = vsel %vm1680, %v1683, %v1685
    %v1687 = vsel %vm1679, %v1666, %v1669
    %v1688 = vsel %vm1682, %v1675, 920167782
    %v1689 = vsel %vm1681, %v1672, %v1688
    %v1690 = vsel %vm1680, %v1687, %v1689
    %v1691 = vsel %vm1679, %v1669, %v1672
    %v1692 = vsel %vm1682, %v1678, 1326507024
    %v1693 = vsel %vm1681, %v1675, %v1692
    %v1694 = vsel %vm1680, %v1691, %v1693
    %v1695 = vshll.u32 %v1655, 8
    %v1696 = vand.u32 %v1695, 65535
    %v1697 = vshrl.u32 %v1695, 16
    %v1698 = vand.u32 %v1694, 65535
    %v1699 = vshrl.u32 %v1694, 16
    %v1700 = vmul.u32 %v1696, %v1698
    %v1701 = vmul.u32 %v1696, %v1699
    %v1702 = vmul.u32 %v1697, %v1698
    %v1703 = vmul.u32 %v1697, %v1699
    %v1704 = vshll.u32 %v1701, 16
    %v1705 = vshrl.u32 %v1701, 16
    %v1706 = vshll.u32 %v1702, 16
    %v1707 = vshrl.u32 %v1702, 16
    %vm1708 = vc.u32 %v1700, %v1704
    %v1709 = vsel %vm1708, 1, 0
    %v1710 = vadd.s32 %v1700, %v1704
    %v1711 = vadd.s32 %v1703, %v1709
    %vm1712 = vc.u32 %v1710, %v1706
    %v1713 = vsel %vm1712, 1, 0
    %v1714 = vadd.s32 %v1710, %v1706
    %v1715 = vadd.s32 %v1711, %v1713
    %v1716 = vadd.s32 %v1715, %v1705
    %v1717 = vadd.s32 %v1716, %v1707
    %v1718 = vand.u32 %v1695, 65535
    %v1719 = vshrl.u32 %v1695, 16
    %v1720 = vand.u32 %v1690, 65535
    %v1721 = vshrl.u32 %v1690, 16
    %v1722 = vmul.u32 %v1718, %v1720
    %v1723 = vmul.u32 %v1718, %v1721
    %v1724 = vmul.u32 %v1719, %v1720
    %v1725 = vmul.u32 %v1719, %v1721
    %v1726 = vshll.u32 %v1723, 16
    %v1727 = vshrl.u32 %v1723, 16
    %v1728 = vshll.u32 %v1724, 16
    %v1729 = vshrl.u32 %v1724, 16
    %vm1730 = vc.u32 %v1722, %v1726
    %v1731 = vsel %vm1730, 1, 0
    %v1732 = vadd.s32 %v1722, %v1726
    %v1733 = vadd.s32 %v1725, %v1731
    %vm1734 = vc.u32 %v1732, %v1728
    %v1735 = vsel %vm1734, 1, 0
    %v1736 = vadd.s32 %v1732, %v1728
    %v1737 = vadd.s32 %v1733, %v1735
    %v1738 = vadd.s32 %v1737, %v1727
    %v1739 = vadd.s32 %v1738, %v1729
    %v1740 = vmul.u32 %v1695, %v1686
    %v1741 = vadd.s32 %v1717, %v1736
    %vm1742 = vc.u32 %v1717, %v1736
    %v1743 = vadd.s32 %v1739, 1
    %v1744 = vsel %vm1742, %v1743, %v1739
    %v1745 = vadd.s32 %v1740, %v1744
    %v1746 = vadd.s32 %v1745, 536870912
    %v1747 = vshrl.u32 %v1746, 30
    %v1748 = vshll.u32 %v1747, 30
    %v1749 = vsub.s32 %v1745, %v1748
    %vm1750 = vcmp.lt.s32.totalorder %v1749, 0
    %v1751 = vsub.s32 0, %v1749
    %v1752 = vsel %vm1750, %v1751, %v1749
    %v1753 = vclz %v1752
    %v1754 = vsub.s32 %v1753, 2
    %vm1755 = vcmp.gt.s32.totalorder 0, %v1754
    %v1756 = vsel %vm1755, 0, %v1754
    %v1757 = vsub.s32 32, %v1756
    %v1758 = vshll.u32 %v1749, %v1756
    %v1759 = vshrl.u32 %v1741, %v1757
    %v1760 = vor.u32 %v1758, %v1759
    %v1761 = vsub.s32 4294967266, %v1756
    %v1762 = vadd.s32 %v1761, 127
    %v1763 = vshll.u32 %v1762, 23
    %v1764 = vor.u32 4788187, %v1763
    %v1765 = vand.u32 2147483647, %v1764
    %v1767 = vcvt.s32.f32 %v1760
    %v1768 = vmul.f32 %v1767, %v1765
    %v1769 = vxor.u32 %v1768, 2147483648
    %v1770 = vsel %vm1649, %v1769, %v1768
    %v1771 = vsub.s32 4, %v1747
    %v1772 = vsel %vm1649, %v1771, %v1747
    %v1773 = vsel %vm1648, %v245, %v1770
    %v1774 = vsel %vm1648, 0, %v1772
    %v1775 = vmul.f32 %v1773, %v1773
    %v1776 = vmul.f32 %v1775, -0.001358992
    %v1777 = vadd.f32 %v1776, 0.041655596
    %v1778 = vmul.f32 %v1775, %v1777
    %v1779 = vadd.f32 %v1778, -0.4999988
    %v1780 = vmul.f32 %v1775, %v1779
    %v1781 = vadd.f32 1.0, %v1780
    %v1782 = vmul.f32 %v1773, %v1773
    %v1783 = vmul.f32 %v1782, -0.00019511016
    %v1784 = vadd.f32 %v1783, 0.008332121
    %v1785 = vmul.f32 %v1782, %v1784
    %v1786 = vadd.f32 %v1785, -0.16666654
    %v1787 = vmul.f32 %v1782, %v1786
    %v1788 = vadd.f32 %v1787, 1.0
    %v1789 = vmul.f32 %v1788, %v1773
    %vm1790 = vweird.f32 %v245
    %v1791 = vadd.s32 %v1774, 3
    %v1792 = vand.u32 %v1791, 3
    %vm1793 = vcmp.lt.s32.totalorder %v1792, 2
    %vm1794 = vcmp.eq.s32.totalorder %v1792, 0
    %v1795 = vxor.u32 %v1789, 2147483648
    %v1796 = vsel %vm1794, %v1781, %v1795
    %vm1797 = vcmp.eq.s32.totalorder %v1792, 2
    %v1798 = vxor.u32 %v1781, 2147483648
    %v1799 = vsel %vm1797, %v1798, %v1789
    %v1800 = vsel %vm1793, %v1796, %v1799
    %v1801 = vsel %vm1790, nan, %v1800
    %v1802 = vand.u32 2147483647, %v246
    %vm1803 = vcmp.le.f32.partialorder %v1802, 0.7853982
    %vm1804 = vcmp.lt.s32.totalorder %v246, 0
    %v1805 = vand.u32 %v246, 2139095040
    %v1806 = vshrl.u32 %v1805, 23
    %v1807 = vsub.s32 %v1806, 127
    %v1808 = vand.u32 2147483647, %v246
    %v1809 = vand.u32 %v1808, 8388607
    %v1810 = vor.u32 %v1809, 8388608
    %v1811 = vsub.s32 0, %v1810
    %v1812 = vadd.s32 %v1807, 1
    %vm1813 = vcmp.gt.s32.totalorder %v1812, 0
    %v1814 = vsel %vm1813, %v1812, 0
    %v1815 = vshrl.u32 %v1814, 5
    %v1816 = vand.u32 %v1814, 31
    %v1817 = vsub.s32 32, %v1816
    %v1818 = vshrl.u32 683565275, %v1817
    %v1819 = vshll.u32 683565275, %v1816
    %v1820 = vshrl.u32 2475754826, %v1817
    %v1821 = vor.u32 %v1819, %v1820
    %v1822 = vshll.u32 2475754826, %v1816
    %v1823 = vshrl.u32 2131351028, %v1817
    %v1824 = vor.u32 %v1822, %v1823
    %v1825 = vshll.u32 2131351028, %v1816
    %v1826 = vshrl.u32 2102212464, %v1817
    %v1827 = vor.u32 %v1825, %v1826
    %v1828 = vshll.u32 2102212464, %v1816
    %v1829 = vshrl.u32 920167782, %v1817
    %v1830 = vor.u32 %v1828, %v1829
    %v1831 = vshll.u32 920167782, %v1816
    %v1832 = vshrl.u32 1326507024, %v1817
    %v1833 = vor.u32 %v1831, %v1832
    %vm1834 = vcmp.lt.s32.totalorder %v1815, 1
    %vm1835 = vcmp.lt.s32.totalorder %v1815, 2
    %vm1836 = vcmp.lt.s32.totalorder %v1815, 3
    %vm1837 = vcmp.lt.s32.totalorder %v1815, 4
    %v1838 = vsel %vm1834, %v1818, %v1821
    %v1839 = vsel %vm1837, %v1827, 2102212464
    %v1840 = vsel %vm1836, %v1824, %v1839
    %v1841 = vsel %vm1835, %v1838, %v1840
    %v1842 = vsel %vm1834, %v1821, %v1824
    %v1843 = vsel %vm1837, %v1830, 920167782
    %v1844 = vsel %vm1836, %v1827, %v1843
    %v1845 = vsel %vm1835, %v1842, %v1844
    %v1846 = vsel %vm1834, %v1824, %v1827
    %v1847 = vsel %vm1837, %v1833, 1326507024
    %v1848 = vsel %vm1836, %v1830, %v1847
    %v1849 = vsel %vm1835, %v1846, %v1848
    %v1850 = vshll.u32 %v1810, 8
    %v1851 = vand.u32 %v1850, 65535
    %v1852 = vshrl.u32 %v1850, 16
    %v1853 = vand.u32 %v1849, 65535
    %v1854 = vshrl.u32 %v1849, 16
    %v1855 = vmul.u32 %v1851, %v1853
    %v1856 = vmul.u32 %v1851, %v1854
    %v1857 = vmul.u32 %v1852, %v1853
    %v1858 = vmul.u32 %v1852, %v1854
    %v1859 = vshll.u32 %v1856, 16
    %v1860 = vshrl.u32 %v1856, 16
    %v1861 = vshll.u32 %v1857, 16
    %v1862 = vshrl.u32 %v1857, 16
    %vm1863 = vc.u32 %v1855, %v1859
    %v1864 = vsel %vm1863, 1, 0
    %v1865 = vadd.s32 %v1855, %v1859
    %v1866 = vadd.s32 %v1858, %v1864
    %vm1867 = vc.u32 %v1865, %v1861
    %v1868 = vsel %vm1867, 1, 0
    %v1869 = vadd.s32 %v1865, %v1861
    %v1870 = vadd.s32 %v1866, %v1868
    %v1871 = vadd.s32 %v1870, %v1860
    %v1872 = vadd.s32 %v1871, %v1862
    %v1873 = vand.u32 %v1850, 65535
    %v1874 = vshrl.u32 %v1850, 16
    %v1875 = vand.u32 %v1845, 65535
    %v1876 = vshrl.u32 %v1845, 16
    %v1877 = vmul.u32 %v1873, %v1875
    %v1878 = vmul.u32 %v1873, %v1876
    %v1879 = vmul.u32 %v1874, %v1875
    %v1880 = vmul.u32 %v1874, %v1876
    %v1881 = vshll.u32 %v1878, 16
    %v1882 = vshrl.u32 %v1878, 16
    %v1883 = vshll.u32 %v1879, 16
    %v1884 = vshrl.u32 %v1879, 16
    %vm1885 = vc.u32 %v1877, %v1881
    %v1886 = vsel %vm1885, 1, 0
    %v1887 = vadd.s32 %v1877, %v1881
    %v1888 = vadd.s32 %v1880, %v1886
    %vm1889 = vc.u32 %v1887, %v1883
    %v1890 = vsel %vm1889, 1, 0
    %v1891 = vadd.s32 %v1887, %v1883
    %v1892 = vadd.s32 %v1888, %v1890
    %v1893 = vadd.s32 %v1892, %v1882
    %v1894 = vadd.s32 %v1893, %v1884
    %v1895 = vmul.u32 %v1850, %v1841
    %v1896 = vadd.s32 %v1872, %v1891
    %vm1897 = vc.u32 %v1872, %v1891
    %v1898 = vadd.s32 %v1894, 1
    %v1899 = vsel %vm1897, %v1898, %v1894
    %v1900 = vadd.s32 %v1895, %v1899
    %v1901 = vadd.s32 %v1900, 536870912
    %v1902 = vshrl.u32 %v1901, 30
    %v1903 = vshll.u32 %v1902, 30
    %v1904 = vsub.s32 %v1900, %v1903
    %vm1905 = vcmp.lt.s32.totalorder %v1904, 0
    %v1906 = vsub.s32 0, %v1904
    %v1907 = vsel %vm1905, %v1906, %v1904
    %v1908 = vclz %v1907
    %v1909 = vsub.s32 %v1908, 2
    %vm1910 = vcmp.gt.s32.totalorder 0, %v1909
    %v1911 = vsel %vm1910, 0, %v1909
    %v1912 = vsub.s32 32, %v1911
    %v1913 = vshll.u32 %v1904, %v1911
    %v1914 = vshrl.u32 %v1896, %v1912
    %v1915 = vor.u32 %v1913, %v1914
    %v1916 = vsub.s32 4294967266, %v1911
    %v1917 = vadd.s32 %v1916, 127
    %v1918 = vshll.u32 %v1917, 23
    %v1919 = vor.u32 4788187, %v1918
    %v1920 = vand.u32 2147483647, %v1919
    %v1922 = vcvt.s32.f32 %v1915
    %v1923 = vmul.f32 %v1922, %v1920
    %v1924 = vxor.u32 %v1923, 2147483648
    %v1925 = vsel %vm1804, %v1924, %v1923
    %v1926 = vsub.s32 4, %v1902
    %v1927 = vsel %vm1804, %v1926, %v1902
    %v1928 = vsel %vm1803, %v246, %v1925
    %v1929 = vsel %vm1803, 0, %v1927
    %v1930 = vmul.f32 %v1928, %v1928
    %v1931 = vmul.f32 %v1930, -0.001358992
    %v1932 = vadd.f32 %v1931, 0.041655596
    %v1933 = vmul.f32 %v1930, %v1932
    %v1934 = vadd.f32 %v1933, -0.4999988
    %v1935 = vmul.f32 %v1930, %v1934
    %v1936 = vadd.f32 1.0, %v1935
    %v1937 = vmul.f32 %v1928, %v1928
    %v1938 = vmul.f32 %v1937, -0.00019511016
    %v1939 = vadd.f32 %v1938, 0.008332121
    %v1940 = vmul.f32 %v1937, %v1939
    %v1941 = vadd.f32 %v1940, -0.16666654
    %v1942 = vmul.f32 %v1937, %v1941
    %v1943 = vadd.f32 %v1942, 1.0
    %v1944 = vmul.f32 %v1943, %v1928
    %vm1945 = vweird.f32 %v246
    %v1946 = vadd.s32 %v1929, 3
    %v1947 = vand.u32 %v1946, 3
    %vm1948 = vcmp.lt.s32.totalorder %v1947, 2
    %vm1949 = vcmp.eq.s32.totalorder %v1947, 0
    %v1950 = vxor.u32 %v1944, 2147483648
    %v1951 = vsel %vm1949, %v1936, %v1950
    %vm1952 = vcmp.eq.s32.totalorder %v1947, 2
    %v1953 = vxor.u32 %v1936, 2147483648
    %v1954 = vsel %vm1952, %v1953, %v1944
    %v1955 = vsel %vm1948, %v1951, %v1954
    %v1956 = vsel %vm1945, nan, %v1955
    %v1957 = vand.u32 2147483647, %v247
    %vm1958 = vcmp.le.f32.partialorder %v1957, 0.7853982
    %vm1959 = vcmp.lt.s32.totalorder %v247, 0
    %v1960 = vand.u32 %v247, 2139095040
    %v1961 = vshrl.u32 %v1960, 23
    %v1962 = vsub.s32 %v1961, 127
    %v1963 = vand.u32 2147483647, %v247
    %v1964 = vand.u32 %v1963, 8388607
    %v1965 = vor.u32 %v1964, 8388608
    %v1966 = vsub.s32 0, %v1965
    %v1967 = vadd.s32 %v1962, 1
    %vm1968 = vcmp.gt.s32.totalorder %v1967, 0
    %v1969 = vsel %vm1968, %v1967, 0
    %v1970 = vshrl.u32 %v1969, 5
    %v1971 = vand.u32 %v1969, 31
    %v1972 = vsub.s32 32, %v1971
    %v1973 = vshrl.u32 683565275, %v1972
    %v1974 = vshll.u32 683565275, %v1971
    %v1975 = vshrl.u32 2475754826, %v1972
    %v1976 = vor.u32 %v1974, %v1975
    %v1977 = vshll.u32 2475754826, %v1971
    %v1978 = vshrl.u32 2131351028, %v1972
    %v1979 = vor.u32 %v1977, %v1978
    %v1980 = vshll.u32 2131351028, %v1971
    %v1981 = vshrl.u32 2102212464, %v1972
    %v1982 = vor.u32 %v1980, %v1981
    %v1983 = vshll.u32 2102212464, %v1971
    %v1984 = vshrl.u32 920167782, %v1972
    %v1985 = vor.u32 %v1983, %v1984
    %v1986 = vshll.u32 920167782, %v1971
    %v1987 = vshrl.u32 1326507024, %v1972
    %v1988 = vor.u32 %v1986, %v1987
    %vm1989 = vcmp.lt.s32.totalorder %v1970, 1
    %vm1990 = vcmp.lt.s32.totalorder %v1970, 2
    %vm1991 = vcmp.lt.s32.totalorder %v1970, 3
    %vm1992 = vcmp.lt.s32.totalorder %v1970, 4
    %v1993 = vsel %vm1989, %v1973, %v1976
    %v1994 = vsel %vm1992, %v1982, 2102212464
    %v1995 = vsel %vm1991, %v1979, %v1994
    %v1996 = vsel %vm1990, %v1993, %v1995
    %v1997 = vsel %vm1989, %v1976, %v1979
    %v1998 = vsel %vm1992, %v1985, 920167782
    %v1999 = vsel %vm1991, %v1982, %v1998
    %v2000 = vsel %vm1990, %v1997, %v1999
    %v2001 = vsel %vm1989, %v1979, %v1982
    %v2002 = vsel %vm1992, %v1988, 1326507024
    %v2003 = vsel %vm1991, %v1985, %v2002
    %v2004 = vsel %vm1990, %v2001, %v2003
    %v2005 = vshll.u32 %v1965, 8
    %v2006 = vand.u32 %v2005, 65535
    %v2007 = vshrl.u32 %v2005, 16
    %v2008 = vand.u32 %v2004, 65535
    %v2009 = vshrl.u32 %v2004, 16
    %v2010 = vmul.u32 %v2006, %v2008
    %v2011 = vmul.u32 %v2006, %v2009
    %v2012 = vmul.u32 %v2007, %v2008
    %v2013 = vmul.u32 %v2007, %v2009
    %v2014 = vshll.u32 %v2011, 16
    %v2015 = vshrl.u32 %v2011, 16
    %v2016 = vshll.u32 %v2012, 16
    %v2017 = vshrl.u32 %v2012, 16
    %vm2018 = vc.u32 %v2010, %v2014
    %v2019 = vsel %vm2018, 1, 0
    %v2020 = vadd.s32 %v2010, %v2014
    %v2021 = vadd.s32 %v2013, %v2019
    %vm2022 = vc.u32 %v2020, %v2016
    %v2023 = vsel %vm2022, 1, 0
    %v2024 = vadd.s32 %v2020, %v2016
    %v2025 = vadd.s32 %v2021, %v2023
    %v2026 = vadd.s32 %v2025, %v2015
    %v2027 = vadd.s32 %v2026, %v2017
    %v2028 = vand.u32 %v2005, 65535
    %v2029 = vshrl.u32 %v2005, 16
    %v2030 = vand.u32 %v2000, 65535
    %v2031 = vshrl.u32 %v2000, 16
    %v2032 = vmul.u32 %v2028, %v2030
    %v2033 = vmul.u32 %v2028, %v2031
    %v2034 = vmul.u32 %v2029, %v2030
    %v2035 = vmul.u32 %v2029, %v2031
    %v2036 = vshll.u32 %v2033, 16
    %v2037 = vshrl.u32 %v2033, 16
    %v2038 = vshll.u32 %v2034, 16
    %v2039 = vshrl.u32 %v2034, 16
    %vm2040 = vc.u32 %v2032, %v2036
    %v2041 = vsel %vm2040, 1, 0
    %v2042 = vadd.s32 %v2032, %v2036
    %v2043 = vadd.s32 %v2035, %v2041
    %vm2044 = vc.u32 %v2042, %v2038
    %v2045 = vsel %vm2044, 1, 0
    %v2046 = vadd.s32 %v2042, %v2038
    %v2047 = vadd.s32 %v2043, %v2045
    %v2048 = vadd.s32 %v2047, %v2037
    %v2049 = vadd.s32 %v2048, %v2039
    %v2050 = vmul.u32 %v2005, %v1996
    %v2051 = vadd.s32 %v2027, %v2046
    %vm2052 = vc.u32 %v2027, %v2046
    %v2053 = vadd.s32 %v2049, 1
    %v2054 = vsel %vm2052, %v2053, %v2049
    %v2055 = vadd.s32 %v2050, %v2054
    %v2056 = vadd.s32 %v2055, 536870912
    %v2057 = vshrl.u32 %v2056, 30
    %v2058 = vshll.u32 %v2057, 30
    %v2059 = vsub.s32 %v2055, %v2058
    %vm2060 = vcmp.lt.s32.totalorder %v2059, 0
    %v2061 = vsub.s32 0, %v2059
    %v2062 = vsel %vm2060, %v2061, %v2059
    %v2063 = vclz %v2062
    %v2064 = vsub.s32 %v2063, 2
    %vm2065 = vcmp.gt.s32.totalorder 0, %v2064
    %v2066 = vsel %vm2065, 0, %v2064
    %v2067 = vsub.s32 32, %v2066
    %v2068 = vshll.u32 %v2059, %v2066
    %v2069 = vshrl.u32 %v2051, %v2067
    %v2070 = vor.u32 %v2068, %v2069
    %v2071 = vsub.s32 4294967266, %v2066
    %v2072 = vadd.s32 %v2071, 127
    %v2073 = vshll.u32 %v2072, 23
    %v2074 = vor.u32 4788187, %v2073
    %v2075 = vand.u32 2147483647, %v2074
    %v2077 = vcvt.s32.f32 %v2070
    %v2078 = vmul.f32 %v2077, %v2075
    %v2079 = vxor.u32 %v2078, 2147483648
    %v2080 = vsel %vm1959, %v2079, %v2078
    %v2081 = vsub.s32 4, %v2057
    %v2082 = vsel %vm1959, %v2081, %v2057
    %v2083 = vsel %vm1958, %v247, %v2080
    %v2084 = vsel %vm1958, 0, %v2082
    %v2085 = vmul.f32 %v2083, %v2083
    %v2086 = vmul.f32 %v2085, -0.001358992
    %v2087 = vadd.f32 %v2086, 0.041655596
    %v2088 = vmul.f32 %v2085, %v2087
    %v2089 = vadd.f32 %v2088, -0.4999988
    %v2090 = vmul.f32 %v2085, %v2089
    %v2091 = vadd.f32 1.0, %v2090
    %v2092 = vmul.f32 %v2083, %v2083
    %v2093 = vmul.f32 %v2092, -0.00019511016
    %v2094 = vadd.f32 %v2093, 0.008332121
    %v2095 = vmul.f32 %v2092, %v2094
    %v2096 = vadd.f32 %v2095, -0.16666654
    %v2097 = vmul.f32 %v2092, %v2096
    %v2098 = vadd.f32 %v2097, 1.0
    %v2099 = vmul.f32 %v2098, %v2083
    %vm2100 = vweird.f32 %v247
    %v2101 = vadd.s32 %v2084, 3
    %v2102 = vand.u32 %v2101, 3
    %vm2103 = vcmp.lt.s32.totalorder %v2102, 2
    %vm2104 = vcmp.eq.s32.totalorder %v2102, 0
    %v2105 = vxor.u32 %v2099, 2147483648
    %v2106 = vsel %vm2104, %v2091, %v2105
    %vm2107 = vcmp.eq.s32.totalorder %v2102, 2
    %v2108 = vxor.u32 %v2091, 2147483648
    %v2109 = vsel %vm2107, %v2108, %v2099
    %v2110 = vsel %vm2103, %v2106, %v2109
    %v2111 = vsel %vm2100, nan, %v2110
    %v2112 = vand.u32 2147483647, %v248
    %vm2113 = vcmp.le.f32.partialorder %v2112, 0.7853982
    %vm2114 = vcmp.lt.s32.totalorder %v248, 0
    %v2115 = vand.u32 %v248, 2139095040
    %v2116 = vshrl.u32 %v2115, 23
    %v2117 = vsub.s32 %v2116, 127
    %v2118 = vand.u32 2147483647, %v248
    %v2119 = vand.u32 %v2118, 8388607
    %v2120 = vor.u32 %v2119, 8388608
    %v2121 = vsub.s32 0, %v2120
    %v2122 = vadd.s32 %v2117, 1
    %vm2123 = vcmp.gt.s32.totalorder %v2122, 0
    %v2124 = vsel %vm2123, %v2122, 0
    %v2125 = vshrl.u32 %v2124, 5
    %v2126 = vand.u32 %v2124, 31
    %v2127 = vsub.s32 32, %v2126
    %v2128 = vshrl.u32 683565275, %v2127
    %v2129 = vshll.u32 683565275, %v2126
    %v2130 = vshrl.u32 2475754826, %v2127
    %v2131 = vor.u32 %v2129, %v2130
    %v2132 = vshll.u32 2475754826, %v2126
    %v2133 = vshrl.u32 2131351028, %v2127
    %v2134 = vor.u32 %v2132, %v2133
    %v2135 = vshll.u32 2131351028, %v2126
    %v2136 = vshrl.u32 2102212464, %v2127
    %v2137 = vor.u32 %v2135, %v2136
    %v2138 = vshll.u32 2102212464, %v2126
    %v2139 = vshrl.u32 920167782, %v2127
    %v2140 = vor.u32 %v2138, %v2139
    %v2141 = vshll.u32 920167782, %v2126
    %v2142 = vshrl.u32 1326507024, %v2127
    %v2143 = vor.u32 %v2141, %v2142
    %vm2144 = vcmp.lt.s32.totalorder %v2125, 1
    %vm2145 = vcmp.lt.s32.totalorder %v2125, 2
    %vm2146 = vcmp.lt.s32.totalorder %v2125, 3
    %vm2147 = vcmp.lt.s32.totalorder %v2125, 4
    %v2148 = vsel %vm2144, %v2128, %v2131
    %v2149 = vsel %vm2147, %v2137, 2102212464
    %v2150 = vsel %vm2146, %v2134, %v2149
    %v2151 = vsel %vm2145, %v2148, %v2150
    %v2152 = vsel %vm2144, %v2131, %v2134
    %v2153 = vsel %vm2147, %v2140, 920167782
    %v2154 = vsel %vm2146, %v2137, %v2153
    %v2155 = vsel %vm2145, %v2152, %v2154
    %v2156 = vsel %vm2144, %v2134, %v2137
    %v2157 = vsel %vm2147, %v2143, 1326507024
    %v2158 = vsel %vm2146, %v2140, %v2157
    %v2159 = vsel %vm2145, %v2156, %v2158
    %v2160 = vshll.u32 %v2120, 8
    %v2161 = vand.u32 %v2160, 65535
    %v2162 = vshrl.u32 %v2160, 16
    %v2163 = vand.u32 %v2159, 65535
    %v2164 = vshrl.u32 %v2159, 16
    %v2165 = vmul.u32 %v2161, %v2163
    %v2166 = vmul.u32 %v2161, %v2164
    %v2167 = vmul.u32 %v2162, %v2163
    %v2168 = vmul.u32 %v2162, %v2164
    %v2169 = vshll.u32 %v2166, 16
    %v2170 = vshrl.u32 %v2166, 16
    %v2171 = vshll.u32 %v2167, 16
    %v2172 = vshrl.u32 %v2167, 16
    %vm2173 = vc.u32 %v2165, %v2169
    %v2174 = vsel %vm2173, 1, 0
    %v2175 = vadd.s32 %v2165, %v2169
    %v2176 = vadd.s32 %v2168, %v2174
    %vm2177 = vc.u32 %v2175, %v2171
    %v2178 = vsel %vm2177, 1, 0
    %v2179 = vadd.s32 %v2175, %v2171
    %v2180 = vadd.s32 %v2176, %v2178
    %v2181 = vadd.s32 %v2180, %v2170
    %v2182 = vadd.s32 %v2181, %v2172
    %v2183 = vand.u32 %v2160, 65535
    %v2184 = vshrl.u32 %v2160, 16
    %v2185 = vand.u32 %v2155, 65535
    %v2186 = vshrl.u32 %v2155, 16
    %v2187 = vmul.u32 %v2183, %v2185
    %v2188 = vmul.u32 %v2183, %v2186
    %v2189 = vmul.u32 %v2184, %v2185
    %v2190 = vmul.u32 %v2184, %v2186
    %v2191 = vshll.u32 %v2188, 16
    %v2192 = vshrl.u32 %v2188, 16
    %v2193 = vshll.u32 %v2189, 16
    %v2194 = vshrl.u32 %v2189, 16
    %vm2195 = vc.u32 %v2187, %v2191
    %v2196 = vsel %vm2195, 1, 0
    %v2197 = vadd.s32 %v2187, %v2191
    %v2198 = vadd.s32 %v2190, %v2196
    %vm2199 = vc.u32 %v2197, %v2193
    %v2200 = vsel %vm2199, 1, 0
    %v2201 = vadd.s32 %v2197, %v2193
    %v2202 = vadd.s32 %v2198, %v2200
    %v2203 = vadd.s32 %v2202, %v2192
    %v2204 = vadd.s32 %v2203, %v2194
    %v2205 = vmul.u32 %v2160, %v2151
    %v2206 = vadd.s32 %v2182, %v2201
    %vm2207 = vc.u32 %v2182, %v2201
    %v2208 = vadd.s32 %v2204, 1
    %v2209 = vsel %vm2207, %v2208, %v2204
    %v2210 = vadd.s32 %v2205, %v2209
    %v2211 = vadd.s32 %v2210, 536870912
    %v2212 = vshrl.u32 %v2211, 30
    %v2213 = vshll.u32 %v2212, 30
    %v2214 = vsub.s32 %v2210, %v2213
    %vm2215 = vcmp.lt.s32.totalorder %v2214, 0
    %v2216 = vsub.s32 0, %v2214
    %v2217 = vsel %vm2215, %v2216, %v2214
    %v2218 = vclz %v2217
    %v2219 = vsub.s32 %v2218, 2
    %vm2220 = vcmp.gt.s32.totalorder 0, %v2219
    %v2221 = vsel %vm2220, 0, %v2219
    %v2222 = vsub.s32 32, %v2221
    %v2223 = vshll.u32 %v2214, %v2221
    %v2224 = vshrl.u32 %v2206, %v2222
    %v2225 = vor.u32 %v2223, %v2224
    %v2226 = vsub.s32 4294967266, %v2221
    %v2227 = vadd.s32 %v2226, 127
    %v2228 = vshll.u32 %v2227, 23
    %v2229 = vor.u32 4788187, %v2228
    %v2230 = vand.u32 2147483647, %v2229
    %v2232 = vcvt.s32.f32 %v2225
    %v2233 = vmul.f32 %v2232, %v2230
    %v2234 = vxor.u32 %v2233, 2147483648
    %v2235 = vsel %vm2114, %v2234, %v2233
    %v2236 = vsub.s32 4, %v2212
    %v2237 = vsel %vm2114, %v2236, %v2212
    %v2238 = vsel %vm2113, %v248, %v2235
    %v2239 = vsel %vm2113, 0, %v2237
    %v2240 = vmul.f32 %v2238, %v2238
    %v2241 = vmul.f32 %v2240, -0.001358992
    %v2242 = vadd.f32 %v2241, 0.041655596
    %v2243 = vmul.f32 %v2240, %v2242
    %v2244 = vadd.f32 %v2243, -0.4999988
    %v2245 = vmul.f32 %v2240, %v2244
    %v2246 = vadd.f32 1.0, %v2245
    %v2247 = vmul.f32 %v2238, %v2238
    %v2248 = vmul.f32 %v2247, -0.00019511016
    %v2249 = vadd.f32 %v2248, 0.008332121
    %v2250 = vmul.f32 %v2247, %v2249
    %v2251 = vadd.f32 %v2250, -0.16666654
    %v2252 = vmul.f32 %v2247, %v2251
    %v2253 = vadd.f32 %v2252, 1.0
    %v2254 = vmul.f32 %v2253, %v2238
    %vm2255 = vweird.f32 %v248
    %v2256 = vadd.s32 %v2239, 3
    %v2257 = vand.u32 %v2256, 3
    %vm2258 = vcmp.lt.s32.totalorder %v2257, 2
    %vm2259 = vcmp.eq.s32.totalorder %v2257, 0
    %v2260 = vxor.u32 %v2254, 2147483648
    %v2261 = vsel %vm2259, %v2246, %v2260
    %vm2262 = vcmp.eq.s32.totalorder %v2257, 2
    %v2263 = vxor.u32 %v2246, 2147483648
    %v2264 = vsel %vm2262, %v2263, %v2254
    %v2265 = vsel %vm2258, %v2261, %v2264
    %v2266 = vsel %vm2255, nan, %v2265
    %v2267 = vand.u32 2147483647, %v249
    %vm2268 = vcmp.le.f32.partialorder %v2267, 0.7853982
    %vm2269 = vcmp.lt.s32.totalorder %v249, 0
    %v2270 = vand.u32 %v249, 2139095040
    %v2271 = vshrl.u32 %v2270, 23
    %v2272 = vsub.s32 %v2271, 127
    %v2273 = vand.u32 2147483647, %v249
    %v2274 = vand.u32 %v2273, 8388607
    %v2275 = vor.u32 %v2274, 8388608
    %v2276 = vsub.s32 0, %v2275
    %v2277 = vadd.s32 %v2272, 1
    %vm2278 = vcmp.gt.s32.totalorder %v2277, 0
    %v2279 = vsel %vm2278, %v2277, 0
    %v2280 = vshrl.u32 %v2279, 5
    %v2281 = vand.u32 %v2279, 31
    %v2282 = vsub.s32 32, %v2281
    %v2283 = vshrl.u32 683565275, %v2282
    %v2284 = vshll.u32 683565275, %v2281
    %v2285 = vshrl.u32 2475754826, %v2282
    %v2286 = vor.u32 %v2284, %v2285
    %v2287 = vshll.u32 2475754826, %v2281
    %v2288 = vshrl.u32 2131351028, %v2282
    %v2289 = vor.u32 %v2287, %v2288
    %v2290 = vshll.u32 2131351028, %v2281
    %v2291 = vshrl.u32 2102212464, %v2282
    %v2292 = vor.u32 %v2290, %v2291
    %v2293 = vshll.u32 2102212464, %v2281
    %v2294 = vshrl.u32 920167782, %v2282
    %v2295 = vor.u32 %v2293, %v2294
    %v2296 = vshll.u32 920167782, %v2281
    %v2297 = vshrl.u32 1326507024, %v2282
    %v2298 = vor.u32 %v2296, %v2297
    %vm2299 = vcmp.lt.s32.totalorder %v2280, 1
    %vm2300 = vcmp.lt.s32.totalorder %v2280, 2
    %vm2301 = vcmp.lt.s32.totalorder %v2280, 3
    %vm2302 = vcmp.lt.s32.totalorder %v2280, 4
    %v2303 = vsel %vm2299, %v2283, %v2286
    %v2304 = vsel %vm2302, %v2292, 2102212464
    %v2305 = vsel %vm2301, %v2289, %v2304
    %v2306 = vsel %vm2300, %v2303, %v2305
    %v2307 = vsel %vm2299, %v2286, %v2289
    %v2308 = vsel %vm2302, %v2295, 920167782
    %v2309 = vsel %vm2301, %v2292, %v2308
    %v2310 = vsel %vm2300, %v2307, %v2309
    %v2311 = vsel %vm2299, %v2289, %v2292
    %v2312 = vsel %vm2302, %v2298, 1326507024
    %v2313 = vsel %vm2301, %v2295, %v2312
    %v2314 = vsel %vm2300, %v2311, %v2313
    %v2315 = vshll.u32 %v2275, 8
    %v2316 = vand.u32 %v2315, 65535
    %v2317 = vshrl.u32 %v2315, 16
    %v2318 = vand.u32 %v2314, 65535
    %v2319 = vshrl.u32 %v2314, 16
    %v2320 = vmul.u32 %v2316, %v2318
    %v2321 = vmul.u32 %v2316, %v2319
    %v2322 = vmul.u32 %v2317, %v2318
    %v2323 = vmul.u32 %v2317, %v2319
    %v2324 = vshll.u32 %v2321, 16
    %v2325 = vshrl.u32 %v2321, 16
    %v2326 = vshll.u32 %v2322, 16
    %v2327 = vshrl.u32 %v2322, 16
    %vm2328 = vc.u32 %v2320, %v2324
    %v2329 = vsel %vm2328, 1, 0
    %v2330 = vadd.s32 %v2320, %v2324
    %v2331 = vadd.s32 %v2323, %v2329
    %vm2332 = vc.u32 %v2330, %v2326
    %v2333 = vsel %vm2332, 1, 0
    %v2334 = vadd.s32 %v2330, %v2326
    %v2335 = vadd.s32 %v2331, %v2333
    %v2336 = vadd.s32 %v2335, %v2325
    %v2337 = vadd.s32 %v2336, %v2327
    %v2338 = vand.u32 %v2315, 65535
    %v2339 = vshrl.u32 %v2315, 16
    %v2340 = vand.u32 %v2310, 65535
    %v2341 = vshrl.u32 %v2310, 16
    %v2342 = vmul.u32 %v2338, %v2340
    %v2343 = vmul.u32 %v2338, %v2341
    %v2344 = vmul.u32 %v2339, %v2340
    %v2345 = vmul.u32 %v2339, %v2341
    %v2346 = vshll.u32 %v2343, 16
    %v2347 = vshrl.u32 %v2343, 16
    %v2348 = vshll.u32 %v2344, 16
    %v2349 = vshrl.u32 %v2344, 16
    %vm2350 = vc.u32 %v2342, %v2346
    %v2351 = vsel %vm2350, 1, 0
    %v2352 = vadd.s32 %v2342, %v2346
    %v2353 = vadd.s32 %v2345, %v2351
    %vm2354 = vc.u32 %v2352, %v2348
    %v2355 = vsel %vm2354, 1, 0
    %v2356 = vadd.s32 %v2352, %v2348
    %v2357 = vadd.s32 %v2353, %v2355
    %v2358 = vadd.s32 %v2357, %v2347
    %v2359 = vadd.s32 %v2358, %v2349
    %v2360 = vmul.u32 %v2315, %v2306
    %v2361 = vadd.s32 %v2337, %v2356
    %vm2362 = vc.u32 %v2337, %v2356
    %v2363 = vadd.s32 %v2359, 1
    %v2364 = vsel %vm2362, %v2363, %v2359
    %v2365 = vadd.s32 %v2360, %v2364
    %v2366 = vadd.s32 %v2365, 536870912
    %v2367 = vshrl.u32 %v2366, 30
    %v2368 = vshll.u32 %v2367, 30
    %v2369 = vsub.s32 %v2365, %v2368
    %vm2370 = vcmp.lt.s32.totalorder %v2369, 0
    %v2371 = vsub.s32 0, %v2369
    %v2372 = vsel %vm2370, %v2371, %v2369
    %v2373 = vclz %v2372
    %v2374 = vsub.s32 %v2373, 2
    %vm2375 = vcmp.gt.s32.totalorder 0, %v2374
    %v2376 = vsel %vm2375, 0, %v2374
    %v2377 = vsub.s32 32, %v2376
    %v2378 = vshll.u32 %v2369, %v2376
    %v2379 = vshrl.u32 %v2361, %v2377
    %v2380 = vor.u32 %v2378, %v2379
    %v2381 = vsub.s32 4294967266, %v2376
    %v2382 = vadd.s32 %v2381, 127
    %v2383 = vshll.u32 %v2382, 23
    %v2384 = vor.u32 4788187, %v2383
    %v2385 = vand.u32 2147483647, %v2384
    %v2387 = vcvt.s32.f32 %v2380
    %v2388 = vmul.f32 %v2387, %v2385
    %v2389 = vxor.u32 %v2388, 2147483648
    %v2390 = vsel %vm2269, %v2389, %v2388
    %v2391 = vsub.s32 4, %v2367
    %v2392 = vsel %vm2269, %v2391, %v2367
    %v2393 = vsel %vm2268, %v249, %v2390
    %v2394 = vsel %vm2268, 0, %v2392
    %v2395 = vmul.f32 %v2393, %v2393
    %v2396 = vmul.f32 %v2395, -0.001358992
    %v2397 = vadd.f32 %v2396, 0.041655596
    %v2398 = vmul.f32 %v2395, %v2397
    %v2399 = vadd.f32 %v2398, -0.4999988
    %v2400 = vmul.f32 %v2395, %v2399
    %v2401 = vadd.f32 1.0, %v2400
    %v2402 = vmul.f32 %v2393, %v2393
    %v2403 = vmul.f32 %v2402, -0.00019511016
    %v2404 = vadd.f32 %v2403, 0.008332121
    %v2405 = vmul.f32 %v2402, %v2404
    %v2406 = vadd.f32 %v2405, -0.16666654
    %v2407 = vmul.f32 %v2402, %v2406
    %v2408 = vadd.f32 %v2407, 1.0
    %v2409 = vmul.f32 %v2408, %v2393
    %vm2410 = vweird.f32 %v249
    %v2411 = vadd.s32 %v2394, 3
    %v2412 = vand.u32 %v2411, 3
    %vm2413 = vcmp.lt.s32.totalorder %v2412, 2
    %vm2414 = vcmp.eq.s32.totalorder %v2412, 0
    %v2415 = vxor.u32 %v2409, 2147483648
    %v2416 = vsel %vm2414, %v2401, %v2415
    %vm2417 = vcmp.eq.s32.totalorder %v2412, 2
    %v2418 = vxor.u32 %v2401, 2147483648
    %v2419 = vsel %vm2417, %v2418, %v2409
    %v2420 = vsel %vm2413, %v2416, %v2419
    %v2421 = vsel %vm2410, nan, %v2420
    %v2422 = vand.u32 2147483647, %v250
    %vm2423 = vcmp.le.f32.partialorder %v2422, 0.7853982
    %vm2424 = vcmp.lt.s32.totalorder %v250, 0
    %v2425 = vand.u32 %v250, 2139095040
    %v2426 = vshrl.u32 %v2425, 23
    %v2427 = vsub.s32 %v2426, 127
    %v2428 = vand.u32 2147483647, %v250
    %v2429 = vand.u32 %v2428, 8388607
    %v2430 = vor.u32 %v2429, 8388608
    %v2431 = vsub.s32 0, %v2430
    %v2432 = vadd.s32 %v2427, 1
    %vm2433 = vcmp.gt.s32.totalorder %v2432, 0
    %v2434 = vsel %vm2433, %v2432, 0
    %v2435 = vshrl.u32 %v2434, 5
    %v2436 = vand.u32 %v2434, 31
    %v2437 = vsub.s32 32, %v2436
    %v2438 = vshrl.u32 683565275, %v2437
    %v2439 = vshll.u32 683565275, %v2436
    %v2440 = vshrl.u32 2475754826, %v2437
    %v2441 = vor.u32 %v2439, %v2440
    %v2442 = vshll.u32 2475754826, %v2436
    %v2443 = vshrl.u32 2131351028, %v2437
    %v2444 = vor.u32 %v2442, %v2443
    %v2445 = vshll.u32 2131351028, %v2436
    %v2446 = vshrl.u32 2102212464, %v2437
    %v2447 = vor.u32 %v2445, %v2446
    %v2448 = vshll.u32 2102212464, %v2436
    %v2449 = vshrl.u32 920167782, %v2437
    %v2450 = vor.u32 %v2448, %v2449
    %v2451 = vshll.u32 920167782, %v2436
    %v2452 = vshrl.u32 1326507024, %v2437
    %v2453 = vor.u32 %v2451, %v2452
    %vm2454 = vcmp.lt.s32.totalorder %v2435, 1
    %vm2455 = vcmp.lt.s32.totalorder %v2435, 2
    %vm2456 = vcmp.lt.s32.totalorder %v2435, 3
    %vm2457 = vcmp.lt.s32.totalorder %v2435, 4
    %v2458 = vsel %vm2454, %v2438, %v2441
    %v2459 = vsel %vm2457, %v2447, 2102212464
    %v2460 = vsel %vm2456, %v2444, %v2459
    %v2461 = vsel %vm2455, %v2458, %v2460
    %v2462 = vsel %vm2454, %v2441, %v2444
    %v2463 = vsel %vm2457, %v2450, 920167782
    %v2464 = vsel %vm2456, %v2447, %v2463
    %v2465 = vsel %vm2455, %v2462, %v2464
    %v2466 = vsel %vm2454, %v2444, %v2447
    %v2467 = vsel %vm2457, %v2453, 1326507024
    %v2468 = vsel %vm2456, %v2450, %v2467
    %v2469 = vsel %vm2455, %v2466, %v2468
    %v2470 = vshll.u32 %v2430, 8
    %v2471 = vand.u32 %v2470, 65535
    %v2472 = vshrl.u32 %v2470, 16
    %v2473 = vand.u32 %v2469, 65535
    %v2474 = vshrl.u32 %v2469, 16
    %v2475 = vmul.u32 %v2471, %v2473
    %v2476 = vmul.u32 %v2471, %v2474
    %v2477 = vmul.u32 %v2472, %v2473
    %v2478 = vmul.u32 %v2472, %v2474
    %v2479 = vshll.u32 %v2476, 16
    %v2480 = vshrl.u32 %v2476, 16
    %v2481 = vshll.u32 %v2477, 16
    %v2482 = vshrl.u32 %v2477, 16
    %vm2483 = vc.u32 %v2475, %v2479
    %v2484 = vsel %vm2483, 1, 0
    %v2485 = vadd.s32 %v2475, %v2479
    %v2486 = vadd.s32 %v2478, %v2484
    %vm2487 = vc.u32 %v2485, %v2481
    %v2488 = vsel %vm2487, 1, 0
    %v2489 = vadd.s32 %v2485, %v2481
    %v2490 = vadd.s32 %v2486, %v2488
    %v2491 = vadd.s32 %v2490, %v2480
    %v2492 = vadd.s32 %v2491, %v2482
    %v2493 = vand.u32 %v2470, 65535
    %v2494 = vshrl.u32 %v2470, 16
    %v2495 = vand.u32 %v2465, 65535
    %v2496 = vshrl.u32 %v2465, 16
    %v2497 = vmul.u32 %v2493, %v2495
    %v2498 = vmul.u32 %v2493, %v2496
    %v2499 = vmul.u32 %v2494, %v2495
    %v2500 = vmul.u32 %v2494, %v2496
    %v2501 = vshll.u32 %v2498, 16
    %v2502 = vshrl.u32 %v2498, 16
    %v2503 = vshll.u32 %v2499, 16
    %v2504 = vshrl.u32 %v2499, 16
    %vm2505 = vc.u32 %v2497, %v2501
    %v2506 = vsel %vm2505, 1, 0
    %v2507 = vadd.s32 %v2497, %v2501
    %v2508 = vadd.s32 %v2500, %v2506
    %vm2509 = vc.u32 %v2507, %v2503
    %v2510 = vsel %vm2509, 1, 0
    %v2511 = vadd.s32 %v2507, %v2503
    %v2512 = vadd.s32 %v2508, %v2510
    %v2513 = vadd.s32 %v2512, %v2502
    %v2514 = vadd.s32 %v2513, %v2504
    %v2515 = vmul.u32 %v2470, %v2461
    %v2516 = vadd.s32 %v2492, %v2511
    %vm2517 = vc.u32 %v2492, %v2511
    %v2518 = vadd.s32 %v2514, 1
    %v2519 = vsel %vm2517, %v2518, %v2514
    %v2520 = vadd.s32 %v2515, %v2519
    %v2521 = vadd.s32 %v2520, 536870912
    %v2522 = vshrl.u32 %v2521, 30
    %v2523 = vshll.u32 %v2522, 30
    %v2524 = vsub.s32 %v2520, %v2523
    %vm2525 = vcmp.lt.s32.totalorder %v2524, 0
    %v2526 = vsub.s32 0, %v2524
    %v2527 = vsel %vm2525, %v2526, %v2524
    %v2528 = vclz %v2527
    %v2529 = vsub.s32 %v2528, 2
    %vm2530 = vcmp.gt.s32.totalorder 0, %v2529
    %v2531 = vsel %vm2530, 0, %v2529
    %v2532 = vsub.s32 32, %v2531
    %v2533 = vshll.u32 %v2524, %v2531
    %v2534 = vshrl.u32 %v2516, %v2532
    %v2535 = vor.u32 %v2533, %v2534
    %v2536 = vsub.s32 4294967266, %v2531
    %v2537 = vadd.s32 %v2536, 127
    %v2538 = vshll.u32 %v2537, 23
    %v2539 = vor.u32 4788187, %v2538
    %v2540 = vand.u32 2147483647, %v2539
    %v2542 = vcvt.s32.f32 %v2535
    %v2543 = vmul.f32 %v2542, %v2540
    %v2544 = vxor.u32 %v2543, 2147483648
    %v2545 = vsel %vm2424, %v2544, %v2543
    %v2546 = vsub.s32 4, %v2522
    %v2547 = vsel %vm2424, %v2546, %v2522
    %v2548 = vsel %vm2423, %v250, %v2545
    %v2549 = vsel %vm2423, 0, %v2547
    %v2550 = vmul.f32 %v2548, %v2548
    %v2551 = vmul.f32 %v2550, -0.001358992
    %v2552 = vadd.f32 %v2551, 0.041655596
    %v2553 = vmul.f32 %v2550, %v2552
    %v2554 = vadd.f32 %v2553, -0.4999988
    %v2555 = vmul.f32 %v2550, %v2554
    %v2556 = vadd.f32 1.0, %v2555
    %v2557 = vmul.f32 %v2548, %v2548
    %v2558 = vmul.f32 %v2557, -0.00019511016
    %v2559 = vadd.f32 %v2558, 0.008332121
    %v2560 = vmul.f32 %v2557, %v2559
    %v2561 = vadd.f32 %v2560, -0.16666654
    %v2562 = vmul.f32 %v2557, %v2561
    %v2563 = vadd.f32 %v2562, 1.0
    %v2564 = vmul.f32 %v2563, %v2548
    %vm2565 = vweird.f32 %v250
    %v2566 = vadd.s32 %v2549, 3
    %v2567 = vand.u32 %v2566, 3
    %vm2568 = vcmp.lt.s32.totalorder %v2567, 2
    %vm2569 = vcmp.eq.s32.totalorder %v2567, 0
    %v2570 = vxor.u32 %v2564, 2147483648
    %v2571 = vsel %vm2569, %v2556, %v2570
    %vm2572 = vcmp.eq.s32.totalorder %v2567, 2
    %v2573 = vxor.u32 %v2556, 2147483648
    %v2574 = vsel %vm2572, %v2573, %v2564
    %v2575 = vsel %vm2568, %v2571, %v2574
    %v2576 = vsel %vm2565, nan, %v2575
    %v2577 = vand.u32 2147483647, %v251
    %vm2578 = vcmp.le.f32.partialorder %v2577, 0.7853982
    %vm2579 = vcmp.lt.s32.totalorder %v251, 0
    %v2580 = vand.u32 %v251, 2139095040
    %v2581 = vshrl.u32 %v2580, 23
    %v2582 = vsub.s32 %v2581, 127
    %v2583 = vand.u32 2147483647, %v251
    %v2584 = vand.u32 %v2583, 8388607
    %v2585 = vor.u32 %v2584, 8388608
    %v2586 = vsub.s32 0, %v2585
    %v2587 = vadd.s32 %v2582, 1
    %vm2588 = vcmp.gt.s32.totalorder %v2587, 0
    %v2589 = vsel %vm2588, %v2587, 0
    %v2590 = vshrl.u32 %v2589, 5
    %v2591 = vand.u32 %v2589, 31
    %v2592 = vsub.s32 32, %v2591
    %v2593 = vshrl.u32 683565275, %v2592
    %v2594 = vshll.u32 683565275, %v2591
    %v2595 = vshrl.u32 2475754826, %v2592
    %v2596 = vor.u32 %v2594, %v2595
    %v2597 = vshll.u32 2475754826, %v2591
    %v2598 = vshrl.u32 2131351028, %v2592
    %v2599 = vor.u32 %v2597, %v2598
    %v2600 = vshll.u32 2131351028, %v2591
    %v2601 = vshrl.u32 2102212464, %v2592
    %v2602 = vor.u32 %v2600, %v2601
    %v2603 = vshll.u32 2102212464, %v2591
    %v2604 = vshrl.u32 920167782, %v2592
    %v2605 = vor.u32 %v2603, %v2604
    %v2606 = vshll.u32 920167782, %v2591
    %v2607 = vshrl.u32 1326507024, %v2592
    %v2608 = vor.u32 %v2606, %v2607
    %vm2609 = vcmp.lt.s32.totalorder %v2590, 1
    %vm2610 = vcmp.lt.s32.totalorder %v2590, 2
    %vm2611 = vcmp.lt.s32.totalorder %v2590, 3
    %vm2612 = vcmp.lt.s32.totalorder %v2590, 4
    %v2613 = vsel %vm2609, %v2593, %v2596
    %v2614 = vsel %vm2612, %v2602, 2102212464
    %v2615 = vsel %vm2611, %v2599, %v2614
    %v2616 = vsel %vm2610, %v2613, %v2615
    %v2617 = vsel %vm2609, %v2596, %v2599
    %v2618 = vsel %vm2612, %v2605, 920167782
    %v2619 = vsel %vm2611, %v2602, %v2618
    %v2620 = vsel %vm2610, %v2617, %v2619
    %v2621 = vsel %vm2609, %v2599, %v2602
    %v2622 = vsel %vm2612, %v2608, 1326507024
    %v2623 = vsel %vm2611, %v2605, %v2622
    %v2624 = vsel %vm2610, %v2621, %v2623
    %v2625 = vshll.u32 %v2585, 8
    %v2626 = vand.u32 %v2625, 65535
    %v2627 = vshrl.u32 %v2625, 16
    %v2628 = vand.u32 %v2624, 65535
    %v2629 = vshrl.u32 %v2624, 16
    %v2630 = vmul.u32 %v2626, %v2628
    %v2631 = vmul.u32 %v2626, %v2629
    %v2632 = vmul.u32 %v2627, %v2628
    %v2633 = vmul.u32 %v2627, %v2629
    %v2634 = vshll.u32 %v2631, 16
    %v2635 = vshrl.u32 %v2631, 16
    %v2636 = vshll.u32 %v2632, 16
    %v2637 = vshrl.u32 %v2632, 16
    %vm2638 = vc.u32 %v2630, %v2634
    %v2639 = vsel %vm2638, 1, 0
    %v2640 = vadd.s32 %v2630, %v2634
    %v2641 = vadd.s32 %v2633, %v2639
    %vm2642 = vc.u32 %v2640, %v2636
    %v2643 = vsel %vm2642, 1, 0
    %v2644 = vadd.s32 %v2640, %v2636
    %v2645 = vadd.s32 %v2641, %v2643
    %v2646 = vadd.s32 %v2645, %v2635
    %v2647 = vadd.s32 %v2646, %v2637
    %v2648 = vand.u32 %v2625, 65535
    %v2649 = vshrl.u32 %v2625, 16
    %v2650 = vand.u32 %v2620, 65535
    %v2651 = vshrl.u32 %v2620, 16
    %v2652 = vmul.u32 %v2648, %v2650
    %v2653 = vmul.u32 %v2648, %v2651
    %v2654 = vmul.u32 %v2649, %v2650
    %v2655 = vmul.u32 %v2649, %v2651
    %v2656 = vshll.u32 %v2653, 16
    %v2657 = vshrl.u32 %v2653, 16
    %v2658 = vshll.u32 %v2654, 16
    %v2659 = vshrl.u32 %v2654, 16
    %vm2660 = vc.u32 %v2652, %v2656
    %v2661 = vsel %vm2660, 1, 0
    %v2662 = vadd.s32 %v2652, %v2656
    %v2663 = vadd.s32 %v2655, %v2661
    %vm2664 = vc.u32 %v2662, %v2658
    %v2665 = vsel %vm2664, 1, 0
    %v2666 = vadd.s32 %v2662, %v2658
    %v2667 = vadd.s32 %v2663, %v2665
    %v2668 = vadd.s32 %v2667, %v2657
    %v2669 = vadd.s32 %v2668, %v2659
    %v2670 = vmul.u32 %v2625, %v2616
    %v2671 = vadd.s32 %v2647, %v2666
    %vm2672 = vc.u32 %v2647, %v2666
    %v2673 = vadd.s32 %v2669, 1
    %v2674 = vsel %vm2672, %v2673, %v2669
    %v2675 = vadd.s32 %v2670, %v2674
    %v2676 = vadd.s32 %v2675, 536870912
    %v2677 = vshrl.u32 %v2676, 30
    %v2678 = vshll.u32 %v2677, 30
    %v2679 = vsub.s32 %v2675, %v2678
    %vm2680 = vcmp.lt.s32.totalorder %v2679, 0
    %v2681 = vsub.s32 0, %v2679
    %v2682 = vsel %vm2680, %v2681, %v2679
    %v2683 = vclz %v2682
    %v2684 = vsub.s32 %v2683, 2
    %vm2685 = vcmp.gt.s32.totalorder 0, %v2684
    %v2686 = vsel %vm2685, 0, %v2684
    %v2687 = vsub.s32 32, %v2686
    %v2688 = vshll.u32 %v2679, %v2686
    %v2689 = vshrl.u32 %v2671, %v2687
    %v2690 = vor.u32 %v2688, %v2689
    %v2691 = vsub.s32 4294967266, %v2686
    %v2692 = vadd.s32 %v2691, 127
    %v2693 = vshll.u32 %v2692, 23
    %v2694 = vor.u32 4788187, %v2693
    %v2695 = vand.u32 2147483647, %v2694
    %v2697 = vcvt.s32.f32 %v2690
    %v2698 = vmul.f32 %v2697, %v2695
    %v2699 = vxor.u32 %v2698, 2147483648
    %v2700 = vsel %vm2579, %v2699, %v2698
    %v2701 = vsub.s32 4, %v2677
    %v2702 = vsel %vm2579, %v2701, %v2677
    %v2703 = vsel %vm2578, %v251, %v2700
    %v2704 = vsel %vm2578, 0, %v2702
    %v2705 = vmul.f32 %v2703, %v2703
    %v2706 = vmul.f32 %v2705, -0.001358992
    %v2707 = vadd.f32 %v2706, 0.041655596
    %v2708 = vmul.f32 %v2705, %v2707
    %v2709 = vadd.f32 %v2708, -0.4999988
    %v2710 = vmul.f32 %v2705, %v2709
    %v2711 = vadd.f32 1.0, %v2710
    %v2712 = vmul.f32 %v2703, %v2703
    %v2713 = vmul.f32 %v2712, -0.00019511016
    %v2714 = vadd.f32 %v2713, 0.008332121
    %v2715 = vmul.f32 %v2712, %v2714
    %v2716 = vadd.f32 %v2715, -0.16666654
    %v2717 = vmul.f32 %v2712, %v2716
    %v2718 = vadd.f32 %v2717, 1.0
    %v2719 = vmul.f32 %v2718, %v2703
    %vm2720 = vweird.f32 %v251
    %v2721 = vadd.s32 %v2704, 3
    %v2722 = vand.u32 %v2721, 3
    %vm2723 = vcmp.lt.s32.totalorder %v2722, 2
    %vm2724 = vcmp.eq.s32.totalorder %v2722, 0
    %v2725 = vxor.u32 %v2719, 2147483648
    %v2726 = vsel %vm2724, %v2711, %v2725
    %vm2727 = vcmp.eq.s32.totalorder %v2722, 2
    %v2728 = vxor.u32 %v2711, 2147483648
    %v2729 = vsel %vm2727, %v2728, %v2719
    %v2730 = vsel %vm2723, %v2726, %v2729
    %v2731 = vsel %vm2720, nan, %v2730
    %v2732 = vmul.f32 %v406, %v108
    %v2733 = vmul.f32 %v561, %v109
    %v2734 = vmul.f32 %v716, %v110
    %v2735 = vmul.f32 %v871, %v111
    %v2736 = vmul.f32 %v1026, %v112
    %v2737 = vmul.f32 %v1181, %v113
    %v2738 = vmul.f32 %v1336, %v114
    %v2739 = vmul.f32 %v1491, %v115
    %v2740 = vmul.f32 %v1646, %v116
    %v2741 = vmul.f32 %v1801, %v117
    %v2742 = vmul.f32 %v1956, %v118
    %v2743 = vmul.f32 %v2111, %v119
    %v2744 = vmul.f32 %v2266, %v120
    %v2745 = vmul.f32 %v2421, %v121
    %v2746 = vmul.f32 %v2576, %v122
    %v2747 = vmul.f32 %v2731, %v123
    %2748 = vxpose.xlu0.b32.start [1/16] %v2732, 128
    %2749 = vxpose.xlu0.b32.cont [2/16] %v2733, 128
    %2750 = vxpose.xlu0.b32.cont [3/16] %v2734, 128
    %2751 = vxpose.xlu0.b32.cont [4/16] %v2735, 128
    %2752 = vxpose.xlu0.b32.cont [5/16] %v2736, 128
    %2753 = vxpose.xlu0.b32.cont [6/16] %v2737, 128
    %2754 = vxpose.xlu0.b32.cont [7/16] %v2738, 128
    %2755 = vxpose.xlu0.b32.cont [8/16] %v2739, 128
    %2756 = vxpose.xlu0.b32.cont [9/16] %v2740, 128
    %2757 = vxpose.xlu0.b32.cont [10/16] %v2741, 128
    %2758 = vxpose.xlu0.b32.cont [11/16] %v2742, 128
    %2759 = vxpose.xlu0.b32.cont [12/16] %v2743, 128
    %2760 = vxpose.xlu0.b32.cont [13/16] %v2744, 128
    %2761 = vxpose.xlu0.b32.cont [14/16] %v2745, 128
    %2762 = vxpose.xlu0.b32.cont [15/16] %v2746, 128
    %2763 = vxpose.xlu0.b32.end [16/16] %v2747, 128
    %v2764 = vpop.trf.xlu0
    %v2765 = vpop.trf.xlu0
    %v2766 = vpop.trf.xlu0
    %v2767 = vpop.trf.xlu0
    %v2768 = vpop.trf.xlu0
    %v2769 = vpop.trf.xlu0
    %v2770 = vpop.trf.xlu0
    %v2771 = vpop.trf.xlu0
    %v2772 = vpop.trf.xlu0
    %v2773 = vpop.trf.xlu0
    %v2774 = vpop.trf.xlu0
    %v2775 = vpop.trf.xlu0
    %v2776 = vpop.trf.xlu0
    %v2777 = vpop.trf.xlu0
    %v2778 = vpop.trf.xlu0
    %v2779 = vpop.trf.xlu0
    %2780 = vst [vmem:[#allocation2] sm:$0xff] %v2764
    %2781 = vst [vmem:[#allocation2 + $0x8] sm:$0xff] %v2765
    // Predicated region
    $region10: #{tpu_custom_call.1} parent=1 // pred_check
      _
    $region11: #{tpu_custom_call.1} parent=1 // pred_check_branch
      %2783 = sbr.rel (0) target = $region13
    $region12: #{tpu_custom_call.1} parent=1 // pred_region
      %2785 = vsyncadd [#allocation3], 0
      %s2786 = sshll.u32 [#allocation2], 4
      %s2787 = int_to_ptr.vmem [resolvable:$true] %s2786
      %s2788 = sshll.u32 %s2, 4
      %s2789 = int_to_ptr.hbm [resolvable:$true] %s2788
      %2794 = dma.vmem_to_hbm [thread:$0]  %s2787, 256, %s2789, [#allocation3], 128, 128, 8
    $region13: #{tpu_custom_call.1} parent=1 // pred_fallthru
      _
    // Predicated region
    $region14: #{tpu_custom_call.1} parent=1 // pred_check
      _
    $region15: #{tpu_custom_call.1} parent=1 // pred_check_branch
      %2796 = sbr.rel (0) target = $region17
    $region16: #{tpu_custom_call.1} parent=1 // pred_region
      %2798 = dma.done [#allocation3], 256
    $region17: #{tpu_custom_call.1} parent=1 // pred_fallthru
      _
    %2799 = vsyncpa [#allocation3], 1

</llo_original>
